<compile_context>
chip_gen: v7x
topology: tpu7x:2x2x1
jax: 0.10.0
libtpu: 0.0.40
codegen_flags: <defaults>
</compile_context>

<pallas_src>
import jax
import jax.numpy as jnp
from jax.experimental import pallas as pl
from jax.experimental.pallas import tpu as pltpu

SUBLANE = 8
LANE = 128


def _round_up(x, m):
    return (x + m - 1) // m * m


# ------------------------------- Pallas kernel -------------------------------

def fused_rnn_kernel(x_ref, w_ih_ref, w_hh_ref, b_ref, w_fc_ref, b_fc_ref,
                     out_ref, h_state, seq_buf):
    """All RNN layers + FC head, one time tile per grid step.

    x_ref:    (TILE_T, B_pad, FEAT)  f32   input tile (time-major)
    w_ih_ref: (L, FEAT, FEAT)        bf16  input->hidden, transposed & padded
    w_hh_ref: (L, FEAT, FEAT)        bf16  hidden->hidden, transposed & padded
    b_ref:    (L, 1, FEAT)           f32   fused bias (b_ih + b_hh), padded
    w_fc_ref: (FEAT, O_PAD)          f32   FC weight, transposed & padded
    b_fc_ref: (1, O_PAD)             f32
    out_ref:  (B_pad, O_PAD)         f32   written only on the last time tile
    h_state:  (L, B_pad, FEAT)       f32   recurrent carry, persists over grid
    seq_buf:  (TILE_T, B_pad, FEAT)  f32   inter-layer activations (VMEM only)
    """
    tile_t, b_pad, feat = x_ref.shape
    num_layers = w_hh_ref.shape[0]
    t_blk = pl.program_id(0)

    # h_state persists across time tiles -> zero it only on the first tile.
    @pl.when(t_blk == 0)
    def _init():
        h_state[...] = jnp.zeros_like(h_state)

    inp = x_ref[...]  # (tile_t, b_pad, feat) f32, layer-0 input for this tile

    for layer in range(num_layers):  # layers fused; static unroll
        last_layer = (layer + 1 == num_layers)

        # ---- hoisted input projection (+ fused bias): one big MXU matmul per
        # (layer, tile), completely off the serial recurrence path. ----------
        xp = (
            jnp.dot(inp.reshape(tile_t * b_pad, feat).astype(jnp.bfloat16),
                    w_ih_ref[layer],
                    preferred_element_type=jnp.float32)
            + b_ref[layer]
        ).reshape(tile_t, b_pad, feat)

        w_hh = w_hh_ref[layer]       # (feat, feat) bf16
        h = h_state[layer]           # (b_pad, feat) f32 recurrent carry

        for t in range(tile_t):      # static unroll: serial path is only
            h = jnp.tanh(            # h @ W_hh (MXU) + add + tanh (EUP), in f32
                xp[t]
                + jnp.dot(h.astype(jnp.bfloat16), w_hh,
                          preferred_element_type=jnp.float32)
            )
            if not last_layer:
                seq_buf[t] = h       # full-tile store; next layer reads VMEM

        h_state[layer] = h

        if not last_layer:
            inp = seq_buf[...]
        # TODO(synk): nn.RNN's inter-layer dropout is training-only; this is
        # the eval-mode forward, so dropout is a no-op.

    # ---- fused FC epilogue: only the final hidden state feeds the FC, so the
    # last layer's (T, B, H) sequence is never materialized in HBM. ----------
    @pl.when(t_blk == pl.num_programs(0) - 1)
    def _fc():
        out_ref[...] = (
            jnp.dot(h_state[num_layers - 1], w_fc_ref[...],
                    preferred_element_type=jnp.float32)
            + b_fc_ref[...]
        ).astype(out_ref.dtype)


# --------------------------------- Wrapper -----------------------------------

def rnn_forward(x, packed, *, tile_t=8):
    """Matches PyTorch RNN.forward: h0 = zeros, out = fc(rnn_out[:, -1, :]).

    x: (B, T, input_size), batch_first like the PyTorch module.
    """
    B, T, D = x.shape
    feat = packed["feat"]
    o_pad = packed["o_pad"]
    O = packed["output_size"]
    L = packed["w_hh"].shape[0]

    b_pad = _round_up(B, SUBLANE)

    # Time tiling: tile_t only has to divide T (it is the leading, non-tiled
    # axis of the time-major block).  Ragged T falls back to a single tile.
    tile_t = min(tile_t, T)
    if T % tile_t != 0:
        tile_t = T
    num_tiles = T // tile_t

    # Single prep pass: pad batch/feature dims AND go time-major, fused into
    # one XLA copy; the BlockSpec then does the time-tiled fetch.
    x_p = jnp.zeros((T, b_pad, feat), jnp.float32)
    x_p = x_p.at[:, :B, :D].set(jnp.transpose(x, (1, 0, 2)).astype(jnp.float32))

    out_pad = pl.pallas_call(
        fused_rnn_kernel,
        out_shape=jax.ShapeDtypeStruct((b_pad, o_pad), jnp.float32),
        grid_spec=pltpu.PrefetchScalarGridSpec(
            num_scalar_prefetch=0,
            grid=(num_tiles,),
            in_specs=[
                pl.BlockSpec((tile_t, b_pad, feat), lambda i: (i, 0, 0)),  # x
                pl.BlockSpec((L, feat, feat), lambda i: (0, 0, 0)),        # W_ih
                pl.BlockSpec((L, feat, feat), lambda i: (0, 0, 0)),        # W_hh
                pl.BlockSpec((L, 1, feat), lambda i: (0, 0, 0)),           # bias
                pl.BlockSpec((feat, o_pad), lambda i: (0, 0)),             # W_fc
                pl.BlockSpec((1, o_pad), lambda i: (0, 0)),                # b_fc
            ],
            out_specs=pl.BlockSpec((b_pad, o_pad), lambda i: (0, 0)),
            scratch_shapes=[
                pltpu.VMEM((L, b_pad, feat), jnp.float32),        # recurrent h
                pltpu.VMEM((tile_t, b_pad, feat), jnp.float32),   # layer acts
            ],
        ),
        compiler_params=pltpu.CompilerParams(
            # recurrence is serial over time -> "arbitrary".
            # TODO(synk): for large B on v7x, add a leading "parallel" batch
            # grid axis so both TensorCores get an independent batch slice.
            dimension_semantics=("arbitrary",),
        ),
    )(x_p, packed["w_ih"], packed["w_hh"], packed["b"],
      packed["fc_w"], packed["fc_b"])

    return out_pad[:B, :O]


# ----------------------------- Parameter handling -----------------------------

def init_params(key, input_size, hidden_size, num_layers, output_size):
    """PyTorch-layout params with PyTorch default init U(-1/sqrt(H), 1/sqrt(H))."""
    k = 1.0 / (hidden_size ** 0.5)
    params = {"layers": []}
    for layer in range(num_layers):
        d_in = input_size if layer == 0 else hidden_size
        key, k1, k2, k3, k4 = jax.random.split(key, 5)
        w_ih = jax.random.uniform(k1, (hidden_size, d_in), jnp.float32, -k, k)
        w_hh = jax.random.uniform(k2, (hidden_size, hidden_size), jnp.float32, -k, k)
        b_ih = jax.random.uniform(k3, (hidden_size,), jnp.float32, -k, k)
        b_hh = jax.random.uniform(k4, (hidden_size,), jnp.float32, -k, k)
        params["layers"].append((w_ih, w_hh, b_ih, b_hh))
    key, k5, k6 = jax.random.split(key, 3)
    params["fc_w"] = jax.random.uniform(k5, (output_size, hidden_size), jnp.float32, -k, k)
    params["fc_b"] = jax.random.uniform(k6, (output_size,), jnp.float32, -k, k)
    return params


def pack_params(params, input_size, hidden_size, output_size):
    """Transpose, pad to (8,128)-friendly tiles, stack layers, cast to bf16.

    A single FEAT = max(round_up(D_in,128), round_up(H,128)) lets all layers'
    weights stack into one (L, FEAT, FEAT) tensor; padded rows/cols are zero so
    padded lanes of the hidden state stay exactly zero (tanh(0)=0).
    """
    L = len(params["layers"])
    feat = max(_round_up(input_size, LANE), _round_up(hidden_size, LANE))
    o_pad = _round_up(output_size, LANE)

    w_ih_s = jnp.zeros((L, feat, feat), jnp.float32)
    w_hh_s = jnp.zeros((L, feat, feat), jnp.float32)
    b_s = jnp.zeros((L, 1, feat), jnp.float32)
    for l, (w_ih, w_hh, b_ih, b_hh) in enumerate(params["layers"]):
        d_in = w_ih.shape[1]
        w_ih_s = w_ih_s.at[l, :d_in, :hidden_size].set(w_ih.T)
        w_hh_s = w_hh_s.at[l, :hidden_size, :hidden_size].set(w_hh.T)
        b_s = b_s.at[l, 0, :hidden_size].set(b_ih + b_hh)  # fused bias

    w_fc = jnp.zeros((feat, o_pad), jnp.float32)
    w_fc = w_fc.at[:hidden_size, :output_size].set(params["fc_w"].T)
    b_fc = jnp.zeros((1, o_pad), jnp.float32)
    b_fc = b_fc.at[0, :output_size].set(params["fc_b"])

    return {
        "w_ih": w_ih_s.astype(jnp.bfloat16),
        "w_hh": w_hh_s.astype(jnp.bfloat16),
        "b": b_s,
        "fc_w": w_fc,
        "fc_b": b_fc,
        "feat": feat,
        "o_pad": o_pad,
        "hidden_size": hidden_size,
        "output_size": output_size,
    }


# ------------------------ Pure-JAX reference (check) -------------------------

def rnn_forward_ref(x, params):
    """Reference with matching bf16-operand / f32-accumulate matmul precision."""
    B, T, _ = x.shape
    h_seq = x.astype(jnp.float32)  # (B, T, D)
    for (w_ih, w_hh, b_ih, b_hh) in params["layers"]:
        H = w_hh.shape[0]
        w_ih_t = w_ih.T.astype(jnp.bfloat16)
        w_hh_t = w_hh.T.astype(jnp.bfloat16)
        b = (b_ih + b_hh)[None, :]
        xp = jnp.dot(h_seq.reshape(B * T, -1).astype(jnp.bfloat16), w_ih_t,
                     preferred_element_type=jnp.float32).reshape(B, T, H) + b
        h = jnp.zeros((B, H), jnp.float32)
        outs = []
        for t in range(T):
            h = jnp.tanh(xp[:, t, :] + jnp.dot(h.astype(jnp.bfloat16), w_hh_t,
                                               preferred_element_type=jnp.float32))
            outs.append(h)
        h_seq = jnp.stack(outs, axis=1)
    return h_seq[:, -1, :] @ params["fc_w"].T + params["fc_b"][None, :]


# ----------------------------------- Main ------------------------------------

if __name__ == "__main__":
    B, T = 2, 16                      # 2 time tiles of 8 -> exercises the carry
    input_size, hidden_size, num_layers, output_size = 16, 32, 2, 4

    key = jax.random.PRNGKey(0)
    key, kx, kp = jax.random.split(key, 3)
    x = jax.random.normal(kx, (B, T, input_size), jnp.float32)

    raw_params = init_params(kp, input_size, hidden_size, num_layers, output_size)
    packed = pack_params(raw_params, input_size, hidden_size, output_size)

    out = rnn_forward(x, packed, tile_t=8)
    out = jax.block_until_ready(out)

    ref = rnn_forward_ref(x, raw_params)
    assert out.shape == (B, output_size)
    max_err = float(jnp.max(jnp.abs(out - ref)))
    assert jnp.allclose(out, ref, atol=5e-3, rtol=5e-3), f"mismatch vs reference: {max_err}"

    print("KERNEL_OK")
</pallas_src>

<mosaic_0001>
module attributes {stable_mosaic.version = 11 : i64} {
  func.func @fused_rnn_kernel(%arg0: i32, %arg1: memref<8x8x128xf32, #tpu.memory_space<vmem>>, %arg2: memref<2x128x128xbf16, #tpu.memory_space<vmem>>, %arg3: memref<2x128x128xbf16, #tpu.memory_space<vmem>>, %arg4: memref<2x1x128xf32, #tpu.memory_space<vmem>>, %arg5: memref<128x128xf32, #tpu.memory_space<vmem>>, %arg6: memref<1x128xf32, #tpu.memory_space<vmem>>, %arg7: memref<8x128xf32, #tpu.memory_space<vmem>>, %arg8: memref<2x8x128xf32, #tpu.memory_space<vmem>>, %arg9: memref<8x8x128xf32, #tpu.memory_space<vmem>>) attributes {dimension_semantics = [#tpu.dimension_semantics<arbitrary>], iteration_bounds = array<i64: 2>, scalar_prefetch = 0 : i64, scratch_operands = 2 : i64, tpu.core_type = #tpu.core_type<tc>, window_params = [{transform_indices = @transform_0, window_bounds = array<i64: 8, 8, 128>}, {pipeline_mode = #tpu.pipeline_mode<synchronous>, transform_indices = @transform_1, window_bounds = array<i64: 2, 128, 128>}, {pipeline_mode = #tpu.pipeline_mode<synchronous>, transform_indices = @transform_2, window_bounds = array<i64: 2, 128, 128>}, {pipeline_mode = #tpu.pipeline_mode<synchronous>, transform_indices = @transform_3, window_bounds = array<i64: 2, 1, 128>}, {pipeline_mode = #tpu.pipeline_mode<synchronous>, transform_indices = @transform_4, window_bounds = array<i64: 128, 128>}, {pipeline_mode = #tpu.pipeline_mode<synchronous>, transform_indices = @transform_5, window_bounds = array<i64: 1, 128>}, {pipeline_mode = #tpu.pipeline_mode<synchronous>, transform_indices = @transform_6, window_bounds = array<i64: 8, 128>}]} {
    %c0_i32 = arith.constant 0 : i32
    %0 = arith.cmpi eq, %arg0, %c0_i32 : i32
    %1 = arith.extui %0 : i1 to i32
    %c0_i32_0 = arith.constant 0 : i32
    %2 = arith.cmpi ne, %1, %c0_i32_0 : i32
    scf.if %2 {
      %cst_71 = arith.constant 0.000000e+00 : f32
      %162 = vector.broadcast %cst_71 : f32 to vector<2x8x128xf32>
      %c0_72 = arith.constant 0 : index
      %c0_73 = arith.constant 0 : index
      %c0_74 = arith.constant 0 : index
      %163 = vector.load %arg8[%c0_72, %c0_73, %c0_74] : memref<2x8x128xf32, #tpu.memory_space<vmem>>, vector<2x8x128xf32>
      tpu.vector_store %arg8[%c0_72, %c0_73, %c0_74], %162 {strides = array<i32>} : memref<2x8x128xf32, #tpu.memory_space<vmem>>, vector<2x8x128xf32>,
    } else {
    }
    %c0 = arith.constant 0 : index
    %c0_1 = arith.constant 0 : index
    %c0_2 = arith.constant 0 : index
    %3 = vector.load %arg1[%c0, %c0_1, %c0_2] : memref<8x8x128xf32, #tpu.memory_space<vmem>>, vector<8x8x128xf32>
    %4 = vector.shape_cast %3 : vector<8x8x128xf32> to vector<64x128xf32>
    %5 = arith.truncf %4 : vector<64x128xf32> to vector<64x128xbf16>
    %c0_3 = arith.constant 0 : index
    %c0_4 = arith.constant 0 : index
    %c0_5 = arith.constant 0 : index
    %6 = vector.load %arg2[%c0_3, %c0_4, %c0_5] : memref<2x128x128xbf16, #tpu.memory_space<vmem>>, vector<1x128x128xbf16>
    %7 = vector.shape_cast %6 : vector<1x128x128xbf16> to vector<128x128xbf16>
    %cst = arith.constant dense<0.000000e+00> : vector<64x128xf32>
    %8 = tpu.matmul %5, %7, %cst {dimension_numbers = #tpu.dot_dimension_numbers<[1], [0], [0], [1], [0, 0, 1, 1], [], []>} : vector<64x128xbf16>, vector<128x128xbf16>, vector<64x128xf32> -> vector<64x128xf32>
    %c0_6 = arith.constant 0 : index
    %c0_7 = arith.constant 0 : index
    %c0_8 = arith.constant 0 : index
    %9 = vector.load %arg4[%c0_6, %c0_7, %c0_8] : memref<2x1x128xf32, #tpu.memory_space<vmem>>, vector<1x1x128xf32>
    %10 = vector.shape_cast %9 : vector<1x1x128xf32> to vector<1x128xf32>
    %11 = vector.broadcast %10 : vector<1x128xf32> to vector<64x128xf32>
    %12 = arith.addf %8, %11 : vector<64x128xf32>
    %13 = vector.shape_cast %12 : vector<64x128xf32> to vector<8x8x128xf32>
    %c0_9 = arith.constant 0 : index
    %c0_10 = arith.constant 0 : index
    %c0_11 = arith.constant 0 : index
    %14 = vector.load %arg3[%c0_9, %c0_10, %c0_11] : memref<2x128x128xbf16, #tpu.memory_space<vmem>>, vector<1x128x128xbf16>
    %15 = vector.shape_cast %14 : vector<1x128x128xbf16> to vector<128x128xbf16>
    %c0_12 = arith.constant 0 : index
    %c0_13 = arith.constant 0 : index
    %c0_14 = arith.constant 0 : index
    %16 = vector.load %arg8[%c0_12, %c0_13, %c0_14] : memref<2x8x128xf32, #tpu.memory_space<vmem>>, vector<1x8x128xf32>
    %17 = vector.shape_cast %16 : vector<1x8x128xf32> to vector<8x128xf32>
    %18 = vector.extract_strided_slice %13 {offsets = [0, 0, 0], sizes = [1, 8, 128], strides = [1, 1, 1]} : vector<8x8x128xf32> to vector<1x8x128xf32>
    %19 = vector.shape_cast %18 : vector<1x8x128xf32> to vector<8x128xf32>
    %20 = arith.truncf %17 : vector<8x128xf32> to vector<8x128xbf16>
    %cst_15 = arith.constant dense<0.000000e+00> : vector<8x128xf32>
    %21 = tpu.matmul %20, %15, %cst_15 {dimension_numbers = #tpu.dot_dimension_numbers<[1], [0], [0], [1], [0, 0, 1, 1], [], []>} : vector<8x128xbf16>, vector<128x128xbf16>, vector<8x128xf32> -> vector<8x128xf32>
    %22 = arith.addf %19, %21 : vector<8x128xf32>
    %23 = math.tanh %22 : vector<8x128xf32>
    %c0_16 = arith.constant 0 : index
    %c0_17 = arith.constant 0 : index
    %c0_18 = arith.constant 0 : index
    %24 = vector.load %arg9[%c0_16, %c0_17, %c0_18] : memref<8x8x128xf32, #tpu.memory_space<vmem>>, vector<1x8x128xf32>
    %25 = vector.shape_cast %24 : vector<1x8x128xf32> to vector<8x128xf32>
    %26 = vector.shape_cast %23 : vector<8x128xf32> to vector<1x8x128xf32>
    tpu.vector_store %arg9[%c0_16, %c0_17, %c0_18], %26 {strides = array<i32>} : memref<8x8x128xf32, #tpu.memory_space<vmem>>, vector<1x8x128xf32>,
    %27 = vector.extract_strided_slice %13 {offsets = [1, 0, 0], sizes = [1, 8, 128], strides = [1, 1, 1]} : vector<8x8x128xf32> to vector<1x8x128xf32>
    %28 = vector.shape_cast %27 : vector<1x8x128xf32> to vector<8x128xf32>
    %29 = arith.truncf %23 : vector<8x128xf32> to vector<8x128xbf16>
    %cst_19 = arith.constant dense<0.000000e+00> : vector<8x128xf32>
    %30 = tpu.matmul %29, %15, %cst_19 {dimension_numbers = #tpu.dot_dimension_numbers<[1], [0], [0], [1], [0, 0, 1, 1], [], []>} : vector<8x128xbf16>, vector<128x128xbf16>, vector<8x128xf32> -> vector<8x128xf32>
    %31 = arith.addf %28, %30 : vector<8x128xf32>
    %32 = math.tanh %31 : vector<8x128xf32>
    %c1 = arith.constant 1 : index
    %c0_20 = arith.constant 0 : index
    %c0_21 = arith.constant 0 : index
    %33 = vector.load %arg9[%c1, %c0_20, %c0_21] : memref<8x8x128xf32, #tpu.memory_space<vmem>>, vector<1x8x128xf32>
    %34 = vector.shape_cast %33 : vector<1x8x128xf32> to vector<8x128xf32>
    %35 = vector.shape_cast %32 : vector<8x128xf32> to vector<1x8x128xf32>
    tpu.vector_store %arg9[%c1, %c0_20, %c0_21], %35 {strides = array<i32>} : memref<8x8x128xf32, #tpu.memory_space<vmem>>, vector<1x8x128xf32>,
    %36 = vector.extract_strided_slice %13 {offsets = [2, 0, 0], sizes = [1, 8, 128], strides = [1, 1, 1]} : vector<8x8x128xf32> to vector<1x8x128xf32>
    %37 = vector.shape_cast %36 : vector<1x8x128xf32> to vector<8x128xf32>
    %38 = arith.truncf %32 : vector<8x128xf32> to vector<8x128xbf16>
    %cst_22 = arith.constant dense<0.000000e+00> : vector<8x128xf32>
    %39 = tpu.matmul %38, %15, %cst_22 {dimension_numbers = #tpu.dot_dimension_numbers<[1], [0], [0], [1], [0, 0, 1, 1], [], []>} : vector<8x128xbf16>, vector<128x128xbf16>, vector<8x128xf32> -> vector<8x128xf32>
    %40 = arith.addf %37, %39 : vector<8x128xf32>
    %41 = math.tanh %40 : vector<8x128xf32>
    %c2 = arith.constant 2 : index
    %c0_23 = arith.constant 0 : index
    %c0_24 = arith.constant 0 : index
    %42 = vector.load %arg9[%c2, %c0_23, %c0_24] : memref<8x8x128xf32, #tpu.memory_space<vmem>>, vector<1x8x128xf32>
    %43 = vector.shape_cast %42 : vector<1x8x128xf32> to vector<8x128xf32>
    %44 = vector.shape_cast %41 : vector<8x128xf32> to vector<1x8x128xf32>
    tpu.vector_store %arg9[%c2, %c0_23, %c0_24], %44 {strides = array<i32>} : memref<8x8x128xf32, #tpu.memory_space<vmem>>, vector<1x8x128xf32>,
    %45 = vector.extract_strided_slice %13 {offsets = [3, 0, 0], sizes = [1, 8, 128], strides = [1, 1, 1]} : vector<8x8x128xf32> to vector<1x8x128xf32>
    %46 = vector.shape_cast %45 : vector<1x8x128xf32> to vector<8x128xf32>
    %47 = arith.truncf %41 : vector<8x128xf32> to vector<8x128xbf16>
    %cst_25 = arith.constant dense<0.000000e+00> : vector<8x128xf32>
    %48 = tpu.matmul %47, %15, %cst_25 {dimension_numbers = #tpu.dot_dimension_numbers<[1], [0], [0], [1], [0, 0, 1, 1], [], []>} : vector<8x128xbf16>, vector<128x128xbf16>, vector<8x128xf32> -> vector<8x128xf32>
    %49 = arith.addf %46, %48 : vector<8x128xf32>
    %50 = math.tanh %49 : vector<8x128xf32>
    %c3 = arith.constant 3 : index
    %c0_26 = arith.constant 0 : index
    %c0_27 = arith.constant 0 : index
    %51 = vector.load %arg9[%c3, %c0_26, %c0_27] : memref<8x8x128xf32, #tpu.memory_space<vmem>>, vector<1x8x128xf32>
    %52 = vector.shape_cast %51 : vector<1x8x128xf32> to vector<8x128xf32>
    %53 = vector.shape_cast %50 : vector<8x128xf32> to vector<1x8x128xf32>
    tpu.vector_store %arg9[%c3, %c0_26, %c0_27], %53 {strides = array<i32>} : memref<8x8x128xf32, #tpu.memory_space<vmem>>, vector<1x8x128xf32>,
    %54 = vector.extract_strided_slice %13 {offsets = [4, 0, 0], sizes = [1, 8, 128], strides = [1, 1, 1]} : vector<8x8x128xf32> to vector<1x8x128xf32>
    %55 = vector.shape_cast %54 : vector<1x8x128xf32> to vector<8x128xf32>
    %56 = arith.truncf %50 : vector<8x128xf32> to vector<8x128xbf16>
    %cst_28 = arith.constant dense<0.000000e+00> : vector<8x128xf32>
    %57 = tpu.matmul %56, %15, %cst_28 {dimension_numbers = #tpu.dot_dimension_numbers<[1], [0], [0], [1], [0, 0, 1, 1], [], []>} : vector<8x128xbf16>, vector<128x128xbf16>, vector<8x128xf32> -> vector<8x128xf32>
    %58 = arith.addf %55, %57 : vector<8x128xf32>
    %59 = math.tanh %58 : vector<8x128xf32>
    %c4 = arith.constant 4 : index
    %c0_29 = arith.constant 0 : index
    %c0_30 = arith.constant 0 : index
    %60 = vector.load %arg9[%c4, %c0_29, %c0_30] : memref<8x8x128xf32, #tpu.memory_space<vmem>>, vector<1x8x128xf32>
    %61 = vector.shape_cast %60 : vector<1x8x128xf32> to vector<8x128xf32>
    %62 = vector.shape_cast %59 : vector<8x128xf32> to vector<1x8x128xf32>
    tpu.vector_store %arg9[%c4, %c0_29, %c0_30], %62 {strides = array<i32>} : memref<8x8x128xf32, #tpu.memory_space<vmem>>, vector<1x8x128xf32>,
    %63 = vector.extract_strided_slice %13 {offsets = [5, 0, 0], sizes = [1, 8, 128], strides = [1, 1, 1]} : vector<8x8x128xf32> to vector<1x8x128xf32>
    %64 = vector.shape_cast %63 : vector<1x8x128xf32> to vector<8x128xf32>
    %65 = arith.truncf %59 : vector<8x128xf32> to vector<8x128xbf16>
    %cst_31 = arith.constant dense<0.000000e+00> : vector<8x128xf32>
    %66 = tpu.matmul %65, %15, %cst_31 {dimension_numbers = #tpu.dot_dimension_numbers<[1], [0], [0], [1], [0, 0, 1, 1], [], []>} : vector<8x128xbf16>, vector<128x128xbf16>, vector<8x128xf32> -> vector<8x128xf32>
    %67 = arith.addf %64, %66 : vector<8x128xf32>
    %68 = math.tanh %67 : vector<8x128xf32>
    %c5 = arith.constant 5 : index
    %c0_32 = arith.constant 0 : index
    %c0_33 = arith.constant 0 : index
    %69 = vector.load %arg9[%c5, %c0_32, %c0_33] : memref<8x8x128xf32, #tpu.memory_space<vmem>>, vector<1x8x128xf32>
    %70 = vector.shape_cast %69 : vector<1x8x128xf32> to vector<8x128xf32>
    %71 = vector.shape_cast %68 : vector<8x128xf32> to vector<1x8x128xf32>
    tpu.vector_store %arg9[%c5, %c0_32, %c0_33], %71 {strides = array<i32>} : memref<8x8x128xf32, #tpu.memory_space<vmem>>, vector<1x8x128xf32>,
    %72 = vector.extract_strided_slice %13 {offsets = [6, 0, 0], sizes = [1, 8, 128], strides = [1, 1, 1]} : vector<8x8x128xf32> to vector<1x8x128xf32>
    %73 = vector.shape_cast %72 : vector<1x8x128xf32> to vector<8x128xf32>
    %74 = arith.truncf %68 : vector<8x128xf32> to vector<8x128xbf16>
    %cst_34 = arith.constant dense<0.000000e+00> : vector<8x128xf32>
    %75 = tpu.matmul %74, %15, %cst_34 {dimension_numbers = #tpu.dot_dimension_numbers<[1], [0], [0], [1], [0, 0, 1, 1], [], []>} : vector<8x128xbf16>, vector<128x128xbf16>, vector<8x128xf32> -> vector<8x128xf32>
    %76 = arith.addf %73, %75 : vector<8x128xf32>
    %77 = math.tanh %76 : vector<8x128xf32>
    %c6 = arith.constant 6 : index
    %c0_35 = arith.constant 0 : index
    %c0_36 = arith.constant 0 : index
    %78 = vector.load %arg9[%c6, %c0_35, %c0_36] : memref<8x8x128xf32, #tpu.memory_space<vmem>>, vector<1x8x128xf32>
    %79 = vector.shape_cast %78 : vector<1x8x128xf32> to vector<8x128xf32>
    %80 = vector.shape_cast %77 : vector<8x128xf32> to vector<1x8x128xf32>
    tpu.vector_store %arg9[%c6, %c0_35, %c0_36], %80 {strides = array<i32>} : memref<8x8x128xf32, #tpu.memory_space<vmem>>, vector<1x8x128xf32>,
    %81 = vector.extract_strided_slice %13 {offsets = [7, 0, 0], sizes = [1, 8, 128], strides = [1, 1, 1]} : vector<8x8x128xf32> to vector<1x8x128xf32>
    %82 = vector.shape_cast %81 : vector<1x8x128xf32> to vector<8x128xf32>
    %83 = arith.truncf %77 : vector<8x128xf32> to vector<8x128xbf16>
    %cst_37 = arith.constant dense<0.000000e+00> : vector<8x128xf32>
    %84 = tpu.matmul %83, %15, %cst_37 {dimension_numbers = #tpu.dot_dimension_numbers<[1], [0], [0], [1], [0, 0, 1, 1], [], []>} : vector<8x128xbf16>, vector<128x128xbf16>, vector<8x128xf32> -> vector<8x128xf32>
    %85 = arith.addf %82, %84 : vector<8x128xf32>
    %86 = math.tanh %85 : vector<8x128xf32>
    %c7 = arith.constant 7 : index
    %c0_38 = arith.constant 0 : index
    %c0_39 = arith.constant 0 : index
    %87 = vector.load %arg9[%c7, %c0_38, %c0_39] : memref<8x8x128xf32, #tpu.memory_space<vmem>>, vector<1x8x128xf32>
    %88 = vector.shape_cast %87 : vector<1x8x128xf32> to vector<8x128xf32>
    %89 = vector.shape_cast %86 : vector<8x128xf32> to vector<1x8x128xf32>
    tpu.vector_store %arg9[%c7, %c0_38, %c0_39], %89 {strides = array<i32>} : memref<8x8x128xf32, #tpu.memory_space<vmem>>, vector<1x8x128xf32>,
    %c0_40 = arith.constant 0 : index
    %c0_41 = arith.constant 0 : index
    %c0_42 = arith.constant 0 : index
    %90 = vector.load %arg8[%c0_40, %c0_41, %c0_42] : memref<2x8x128xf32, #tpu.memory_space<vmem>>, vector<1x8x128xf32>
    %91 = vector.shape_cast %90 : vector<1x8x128xf32> to vector<8x128xf32>
    %92 = vector.shape_cast %86 : vector<8x128xf32> to vector<1x8x128xf32>
    tpu.vector_store %arg8[%c0_40, %c0_41, %c0_42], %92 {strides = array<i32>} : memref<2x8x128xf32, #tpu.memory_space<vmem>>, vector<1x8x128xf32>,
    %c0_43 = arith.constant 0 : index
    %c0_44 = arith.constant 0 : index
    %c0_45 = arith.constant 0 : index
    %93 = vector.load %arg9[%c0_43, %c0_44, %c0_45] : memref<8x8x128xf32, #tpu.memory_space<vmem>>, vector<8x8x128xf32>
    %94 = vector.shape_cast %93 : vector<8x8x128xf32> to vector<64x128xf32>
    %95 = arith.truncf %94 : vector<64x128xf32> to vector<64x128xbf16>
    %c1_46 = arith.constant 1 : index
    %c0_47 = arith.constant 0 : index
    %c0_48 = arith.constant 0 : index
    %96 = vector.load %arg2[%c1_46, %c0_47, %c0_48] : memref<2x128x128xbf16, #tpu.memory_space<vmem>>, vector<1x128x128xbf16>
    %97 = vector.shape_cast %96 : vector<1x128x128xbf16> to vector<128x128xbf16>
    %cst_49 = arith.constant dense<0.000000e+00> : vector<64x128xf32>
    %98 = tpu.matmul %95, %97, %cst_49 {dimension_numbers = #tpu.dot_dimension_numbers<[1], [0], [0], [1], [0, 0, 1, 1], [], []>} : vector<64x128xbf16>, vector<128x128xbf16>, vector<64x128xf32> -> vector<64x128xf32>
    %c1_50 = arith.constant 1 : index
    %c0_51 = arith.constant 0 : index
    %c0_52 = arith.constant 0 : index
    %99 = vector.load %arg4[%c1_50, %c0_51, %c0_52] : memref<2x1x128xf32, #tpu.memory_space<vmem>>, vector<1x1x128xf32>
    %100 = vector.shape_cast %99 : vector<1x1x128xf32> to vector<1x128xf32>
    %101 = vector.broadcast %100 : vector<1x128xf32> to vector<64x128xf32>
    %102 = arith.addf %98, %101 : vector<64x128xf32>
    %103 = vector.shape_cast %102 : vector<64x128xf32> to vector<8x8x128xf32>
    %c1_53 = arith.constant 1 : index
    %c0_54 = arith.constant 0 : index
    %c0_55 = arith.constant 0 : index
    %104 = vector.load %arg3[%c1_53, %c0_54, %c0_55] : memref<2x128x128xbf16, #tpu.memory_space<vmem>>, vector<1x128x128xbf16>
    %105 = vector.shape_cast %104 : vector<1x128x128xbf16> to vector<128x128xbf16>
    %c1_56 = arith.constant 1 : index
    %c0_57 = arith.constant 0 : index
    %c0_58 = arith.constant 0 : index
    %106 = vector.load %arg8[%c1_56, %c0_57, %c0_58] : memref<2x8x128xf32, #tpu.memory_space<vmem>>, vector<1x8x128xf32>
    %107 = vector.shape_cast %106 : vector<1x8x128xf32> to vector<8x128xf32>
    %108 = vector.extract_strided_slice %103 {offsets = [0, 0, 0], sizes = [1, 8, 128], strides = [1, 1, 1]} : vector<8x8x128xf32> to vector<1x8x128xf32>
    %109 = vector.shape_cast %108 : vector<1x8x128xf32> to vector<8x128xf32>
    %110 = arith.truncf %107 : vector<8x128xf32> to vector<8x128xbf16>
    %cst_59 = arith.constant dense<0.000000e+00> : vector<8x128xf32>
    %111 = tpu.matmul %110, %105, %cst_59 {dimension_numbers = #tpu.dot_dimension_numbers<[1], [0], [0], [1], [0, 0, 1, 1], [], []>} : vector<8x128xbf16>, vector<128x128xbf16>, vector<8x128xf32> -> vector<8x128xf32>
    %112 = arith.addf %109, %111 : vector<8x128xf32>
    %113 = math.tanh %112 : vector<8x128xf32>
    %114 = vector.extract_strided_slice %103 {offsets = [1, 0, 0], sizes = [1, 8, 128], strides = [1, 1, 1]} : vector<8x8x128xf32> to vector<1x8x128xf32>
    %115 = vector.shape_cast %114 : vector<1x8x128xf32> to vector<8x128xf32>
    %116 = arith.truncf %113 : vector<8x128xf32> to vector<8x128xbf16>
    %cst_60 = arith.constant dense<0.000000e+00> : vector<8x128xf32>
    %117 = tpu.matmul %116, %105, %cst_60 {dimension_numbers = #tpu.dot_dimension_numbers<[1], [0], [0], [1], [0, 0, 1, 1], [], []>} : vector<8x128xbf16>, vector<128x128xbf16>, vector<8x128xf32> -> vector<8x128xf32>
    %118 = arith.addf %115, %117 : vector<8x128xf32>
    %119 = math.tanh %118 : vector<8x128xf32>
    %120 = vector.extract_strided_slice %103 {offsets = [2, 0, 0], sizes = [1, 8, 128], strides = [1, 1, 1]} : vector<8x8x128xf32> to vector<1x8x128xf32>
    %121 = vector.shape_cast %120 : vector<1x8x128xf32> to vector<8x128xf32>
    %122 = arith.truncf %119 : vector<8x128xf32> to vector<8x128xbf16>
    %cst_61 = arith.constant dense<0.000000e+00> : vector<8x128xf32>
    %123 = tpu.matmul %122, %105, %cst_61 {dimension_numbers = #tpu.dot_dimension_numbers<[1], [0], [0], [1], [0, 0, 1, 1], [], []>} : vector<8x128xbf16>, vector<128x128xbf16>, vector<8x128xf32> -> vector<8x128xf32>
    %124 = arith.addf %121, %123 : vector<8x128xf32>
    %125 = math.tanh %124 : vector<8x128xf32>
    %126 = vector.extract_strided_slice %103 {offsets = [3, 0, 0], sizes = [1, 8, 128], strides = [1, 1, 1]} : vector<8x8x128xf32> to vector<1x8x128xf32>
    %127 = vector.shape_cast %126 : vector<1x8x128xf32> to vector<8x128xf32>
    %128 = arith.truncf %125 : vector<8x128xf32> to vector<8x128xbf16>
    %cst_62 = arith.constant dense<0.000000e+00> : vector<8x128xf32>
    %129 = tpu.matmul %128, %105, %cst_62 {dimension_numbers = #tpu.dot_dimension_numbers<[1], [0], [0], [1], [0, 0, 1, 1], [], []>} : vector<8x128xbf16>, vector<128x128xbf16>, vector<8x128xf32> -> vector<8x128xf32>
    %130 = arith.addf %127, %129 : vector<8x128xf32>
    %131 = math.tanh %130 : vector<8x128xf32>
    %132 = vector.extract_strided_slice %103 {offsets = [4, 0, 0], sizes = [1, 8, 128], strides = [1, 1, 1]} : vector<8x8x128xf32> to vector<1x8x128xf32>
    %133 = vector.shape_cast %132 : vector<1x8x128xf32> to vector<8x128xf32>
    %134 = arith.truncf %131 : vector<8x128xf32> to vector<8x128xbf16>
    %cst_63 = arith.constant dense<0.000000e+00> : vector<8x128xf32>
    %135 = tpu.matmul %134, %105, %cst_63 {dimension_numbers = #tpu.dot_dimension_numbers<[1], [0], [0], [1], [0, 0, 1, 1], [], []>} : vector<8x128xbf16>, vector<128x128xbf16>, vector<8x128xf32> -> vector<8x128xf32>
    %136 = arith.addf %133, %135 : vector<8x128xf32>
    %137 = math.tanh %136 : vector<8x128xf32>
    %138 = vector.extract_strided_slice %103 {offsets = [5, 0, 0], sizes = [1, 8, 128], strides = [1, 1, 1]} : vector<8x8x128xf32> to vector<1x8x128xf32>
    %139 = vector.shape_cast %138 : vector<1x8x128xf32> to vector<8x128xf32>
    %140 = arith.truncf %137 : vector<8x128xf32> to vector<8x128xbf16>
    %cst_64 = arith.constant dense<0.000000e+00> : vector<8x128xf32>
    %141 = tpu.matmul %140, %105, %cst_64 {dimension_numbers = #tpu.dot_dimension_numbers<[1], [0], [0], [1], [0, 0, 1, 1], [], []>} : vector<8x128xbf16>, vector<128x128xbf16>, vector<8x128xf32> -> vector<8x128xf32>
    %142 = arith.addf %139, %141 : vector<8x128xf32>
    %143 = math.tanh %142 : vector<8x128xf32>
    %144 = vector.extract_strided_slice %103 {offsets = [6, 0, 0], sizes = [1, 8, 128], strides = [1, 1, 1]} : vector<8x8x128xf32> to vector<1x8x128xf32>
    %145 = vector.shape_cast %144 : vector<1x8x128xf32> to vector<8x128xf32>
    %146 = arith.truncf %143 : vector<8x128xf32> to vector<8x128xbf16>
    %cst_65 = arith.constant dense<0.000000e+00> : vector<8x128xf32>
    %147 = tpu.matmul %146, %105, %cst_65 {dimension_numbers = #tpu.dot_dimension_numbers<[1], [0], [0], [1], [0, 0, 1, 1], [], []>} : vector<8x128xbf16>, vector<128x128xbf16>, vector<8x128xf32> -> vector<8x128xf32>
    %148 = arith.addf %145, %147 : vector<8x128xf32>
    %149 = math.tanh %148 : vector<8x128xf32>
    %150 = vector.extract_strided_slice %103 {offsets = [7, 0, 0], sizes = [1, 8, 128], strides = [1, 1, 1]} : vector<8x8x128xf32> to vector<1x8x128xf32>
    %151 = vector.shape_cast %150 : vector<1x8x128xf32> to vector<8x128xf32>
    %152 = arith.truncf %149 : vector<8x128xf32> to vector<8x128xbf16>
    %cst_66 = arith.constant dense<0.000000e+00> : vector<8x128xf32>
    %153 = tpu.matmul %152, %105, %cst_66 {dimension_numbers = #tpu.dot_dimension_numbers<[1], [0], [0], [1], [0, 0, 1, 1], [], []>} : vector<8x128xbf16>, vector<128x128xbf16>, vector<8x128xf32> -> vector<8x128xf32>
    %154 = arith.addf %151, %153 : vector<8x128xf32>
    %155 = math.tanh %154 : vector<8x128xf32>
    %c1_67 = arith.constant 1 : index
    %c0_68 = arith.constant 0 : index
    %c0_69 = arith.constant 0 : index
    %156 = vector.load %arg8[%c1_67, %c0_68, %c0_69] : memref<2x8x128xf32, #tpu.memory_space<vmem>>, vector<1x8x128xf32>
    %157 = vector.shape_cast %156 : vector<1x8x128xf32> to vector<8x128xf32>
    %158 = vector.shape_cast %155 : vector<8x128xf32> to vector<1x8x128xf32>
    tpu.vector_store %arg8[%c1_67, %c0_68, %c0_69], %158 {strides = array<i32>} : memref<2x8x128xf32, #tpu.memory_space<vmem>>, vector<1x8x128xf32>,
    %c1_i32 = arith.constant 1 : i32
    %159 = arith.cmpi eq, %arg0, %c1_i32 : i32
    %160 = arith.extui %159 : i1 to i32
    %c0_i32_70 = arith.constant 0 : i32
    %161 = arith.cmpi ne, %160, %c0_i32_70 : i32
    scf.if %161 {
      %c1_71 = arith.constant 1 : index
      %c0_72 = arith.constant 0 : index
      %c0_73 = arith.constant 0 : index
      %162 = vector.load %arg8[%c1_71, %c0_72, %c0_73] : memref<2x8x128xf32, #tpu.memory_space<vmem>>, vector<1x8x128xf32>
      %163 = vector.shape_cast %162 : vector<1x8x128xf32> to vector<8x128xf32>
      %c0_74 = arith.constant 0 : index
      %c0_75 = arith.constant 0 : index
      %164 = vector.load %arg5[%c0_74, %c0_75] : memref<128x128xf32, #tpu.memory_space<vmem>>, vector<128x128xf32>
      %cst_76 = arith.constant dense<0.000000e+00> : vector<8x128xf32>
      %165 = tpu.matmul %163, %164, %cst_76 {dimension_numbers = #tpu.dot_dimension_numbers<[1], [0], [0], [1], [0, 0, 1, 1], [], []>} : vector<8x128xf32>, vector<128x128xf32>, vector<8x128xf32> -> vector<8x128xf32>
      %c0_77 = arith.constant 0 : index
      %c0_78 = arith.constant 0 : index
      %166 = vector.load %arg6[%c0_77, %c0_78] : memref<1x128xf32, #tpu.memory_space<vmem>>, vector<1x128xf32>
      %167 = vector.broadcast %166 : vector<1x128xf32> to vector<8x128xf32>
      %168 = arith.addf %165, %167 : vector<8x128xf32>
      %c0_79 = arith.constant 0 : index
      %c0_80 = arith.constant 0 : index
      %169 = vector.load %arg7[%c0_79, %c0_80] : memref<8x128xf32, #tpu.memory_space<vmem>>, vector<8x128xf32>
      tpu.vector_store %arg7[%c0_79, %c0_80], %168 {strides = array<i32>} : memref<8x128xf32, #tpu.memory_space<vmem>>, vector<8x128xf32>,
    } else {
    }
    return
  }
  func.func @transform_0(%arg0: i32) -> (i32, i32, i32) {
    %c0_i32 = arith.constant 0 : i32
    %c0_i32_0 = arith.constant 0 : i32
    %c0_i32_1 = arith.constant 0 : i32
    return %arg0, %c0_i32, %c0_i32_0 : i32, i32, i32
  }
  func.func @transform_1(%arg0: i32) -> (i32, i32, i32) {
    %c0_i32 = arith.constant 0 : i32
    %c0_i32_0 = arith.constant 0 : i32
    %c0_i32_1 = arith.constant 0 : i32
    %c0_i32_2 = arith.constant 0 : i32
    return %c0_i32, %c0_i32_0, %c0_i32_1 : i32, i32, i32
  }
  func.func @transform_2(%arg0: i32) -> (i32, i32, i32) {
    %c0_i32 = arith.constant 0 : i32
    %c0_i32_0 = arith.constant 0 : i32
    %c0_i32_1 = arith.constant 0 : i32
    %c0_i32_2 = arith.constant 0 : i32
    return %c0_i32, %c0_i32_0, %c0_i32_1 : i32, i32, i32
  }
  func.func @transform_3(%arg0: i32) -> (i32, i32, i32) {
    %c0_i32 = arith.constant 0 : i32
    %c0_i32_0 = arith.constant 0 : i32
    %c0_i32_1 = arith.constant 0 : i32
    %c0_i32_2 = arith.constant 0 : i32
    return %c0_i32, %c0_i32_0, %c0_i32_1 : i32, i32, i32
  }
  func.func @transform_4(%arg0: i32) -> (i32, i32) {
    %c0_i32 = arith.constant 0 : i32
    %c0_i32_0 = arith.constant 0 : i32
    %c0_i32_1 = arith.constant 0 : i32
    return %c0_i32, %c0_i32_0 : i32, i32
  }
  func.func @transform_5(%arg0: i32) -> (i32, i32) {
    %c0_i32 = arith.constant 0 : i32
    %c0_i32_0 = arith.constant 0 : i32
    %c0_i32_1 = arith.constant 0 : i32
    return %c0_i32, %c0_i32_0 : i32, i32
  }
  func.func @transform_6(%arg0: i32) -> (i32, i32) {
    %c0_i32 = arith.constant 0 : i32
    %c0_i32_0 = arith.constant 0 : i32
    %c0_i32_1 = arith.constant 0 : i32
    return %c0_i32, %c0_i32_0 : i32, i32
  }
}

</mosaic_0001>

<llo_original>
// kernel: tpu_custom_call.1
$region0: #{tpu_custom_call.1}
  #allocation0 [shape = 'u32[]', space=smem, size = 0x4, offset = 0x4, fixed_abs, tag = 'smem constant byte address 0x4 - core index']
  #allocation1 [shape = 'u32[144,128]{1,0:T(1,128)}', space=vmem, size = 0x12000, scoped, tag = 'internal scratch']
  #allocation2 [shape = 'f32[2,8,128]{2,1,0:T(8,128)}', space=vmem, size = 0x2000, scoped, tag = 'scratch operand']
  #allocation3 [shape = 'f32[8,8,128]{2,1,0:T(8,128)}', space=vmem, size = 0x8000, scoped, tag = 'scratch operand']
  %s0 = inlined_call_operand.hbm [shape: f32[16,8,128], index: 0, kind: input, shape index: {}]
  %s1 = inlined_call_operand.hbm [shape: bf16[2,128,128], index: 1, kind: input, shape index: {}]
  %s2 = inlined_call_operand.hbm [shape: bf16[2,128,128], index: 2, kind: input, shape index: {}]
  %s3 = inlined_call_operand.vmem [shape: f32[2,1,128], index: 3, kind: input, shape index: {}]
  %s4 = inlined_call_operand.hbm [shape: f32[128,128], index: 4, kind: input, shape index: {}]
  %s5 = inlined_call_operand.vmem [shape: f32[1,128], index: 5, kind: input, shape index: {}]
  %s6 = inlined_call_operand.hbm [shape: f32[8,128], index: 6, kind: output, shape index: {}]
  %s7 = sld [smem:[#allocation0]]
  $region81: #{tpu_custom_call.1} parent=0
    _
  %s9 = ssub.s32 1, %s7
  %s10 = scalar_select 0, %s9, %s7
  $region1: #{tpu_custom_call.1} parent=0
    #allocation4 [shape = 'u8[65536]{0}', space=vmem, size = 0x10000, scoped, tag = 'input window, operand 0']
    #allocation5 [shape = 's32[2]{0}', space=sflag, size = 0x8, scoped, tag = 'scoped memory for tpu_custom_call.1']
    #allocation6 [shape = 's32[2]{0}', space=sflag, size = 0x8, scoped, tag = 'scoped memory for tpu_custom_call.1']
    #allocation7 [shape = 'u8[65536]{0}', space=vmem, size = 0x10000, scoped, tag = 'input window, operand 1, single buffered']
    #allocation8 [shape = 's32[1]{0}', space=sflag, size = 0x4, scoped, tag = 'scoped memory for tpu_custom_call.1']
    #allocation9 [shape = 'u8[65536]{0}', space=vmem, size = 0x10000, scoped, tag = 'input window, operand 2, single buffered']
    #allocation10 [shape = 'u8[65536]{0}', space=vmem, size = 0x10000, scoped, tag = 'input window, operand 4, single buffered']
    #allocation11 [shape = 's32[1]{0}', space=sflag, size = 0x4, scoped, tag = 'scoped memory for tpu_custom_call.1']
    #allocation12 [shape = 'u8[4096]{0}', space=vmem, size = 0x1000, scoped, tag = 'output window, operand 0, single buffered']
    %11 = vsyncpa [#allocation5], 0
    %s12 = scalar_lea.sflag [#allocation5], 1
    %13 = vsyncpa %s12, 0
    %14 = vsyncpa [#allocation8], 0
    %15 = vsyncpa [#allocation11], 0
    %16 = vsyncpa [#allocation6], 0
    loop: start=0, step=1, limit=4
    $region2: #{tpu_custom_call.1} parent=1 // loop_pre_header
      _
    $region3: #{tpu_custom_call.1} parent=1 // loop_header
      %s18 = sphi 0, %s22
      %p19 = scmp.ge.s32.totalorder %s18, 4
      %s28 = sphi 0, %s30
      %s31 = sphi 0, %s28
      %s32 = sphi 0, %s31
      %s48 = sphi 0, %s32
      %s52 = sphi 0, %s52
      %s54 = sphi 0, %s52
      %s55 = sphi 0, %s54
      %s69 = sphi 0, %s55
      %s73 = sphi 0, %s73
      %s75 = sphi 0, %s73
      %s76 = sphi 0, %s75
      %s90 = sphi 0, %s76
      %s94 = sphi 0, %s94
      %s96 = sphi 0, %s94
      %s97 = sphi 0, %s96
      %s111 = sphi 0, %s97
      %s115 = sphi 0, %s115
      %s117 = sphi 0, %s115
      %s118 = sphi 0, %s117
      %s132 = sphi 0, %s118
      %s136 = sphi 0, %s136
      %s138 = sphi 0, %s136
      %s139 = sphi 0, %s138
      %s153 = sphi 0, %s139
      %s157 = sphi 0, %s157
      %s159 = sphi 0, %s157
      %s160 = sphi 0, %s159
      %s174 = sphi 0, %s160
    $region4: #{tpu_custom_call.1} parent=1 // loop_header_branch
      %21 = sbr.rel (%p19) target = $region8
    $region5: #{tpu_custom_call.1} parent=1 // loop_body
      %s23 = ssub.s32 %s18, 1
      %s24 = ssub.s32 %s18, 2
      %s25 = sadd.s32 %s18, 1
      %s26 = ssub.s32 %s18, %s25
      %p27 = scmp.eq.s32.totalorder %s26, 0
      %s29 = sadd.s32 %s28, 1
      %s30 = scalar_select %p27, %s28, %s29
      %p33 = pneg %p27
      %p34 = scmp.eq.s32.totalorder %s18, 1
      %p35 = por %p33, %p34
      %p36 = scmp.ne.s32.totalorder %s28, %s31
      %p37 = scmp.eq.s32.totalorder %s18, 0
      %p38 = por %p36, %p37
      %p39 = scmp.ne.s32.totalorder %s28, %s31
      %p40 = scmp.eq.s32.totalorder %s23, 1
      %p41 = por %p39, %p40
      %p42 = scmp.ne.s32.totalorder %s31, %s32
      %p43 = scmp.eq.s32.totalorder %s23, 0
      %p44 = por %p42, %p43
      %p45 = scmp.ne.s32.totalorder %s31, %s32
      %p46 = scmp.eq.s32.totalorder %s24, 1
      %p47 = por %p45, %p46
      %p49 = scmp.ne.s32.totalorder %s32, %s48
      %p50 = scmp.eq.s32.totalorder %s24, 0
      %p51 = por %p49, %p50
      %s53 = sadd.s32 %s52, 1
      %p56 = scmp.eq.s32.totalorder %s18, 1
      %p57 = scmp.ne.s32.totalorder %s52, %s54
      %p58 = scmp.eq.s32.totalorder %s18, 0
      %p59 = por %p57, %p58
      %p60 = scmp.ne.s32.totalorder %s52, %s54
      %p61 = scmp.eq.s32.totalorder %s23, 1
      %p62 = por %p60, %p61
      %p63 = scmp.ne.s32.totalorder %s54, %s55
      %p64 = scmp.eq.s32.totalorder %s23, 0
      %p65 = por %p63, %p64
      %p66 = scmp.ne.s32.totalorder %s54, %s55
      %p67 = scmp.eq.s32.totalorder %s24, 1
      %p68 = por %p66, %p67
      %p70 = scmp.ne.s32.totalorder %s55, %s69
      %p71 = scmp.eq.s32.totalorder %s24, 0
      %p72 = por %p70, %p71
      %s74 = sadd.s32 %s73, 1
      %p77 = scmp.eq.s32.totalorder %s18, 1
      %p78 = scmp.ne.s32.totalorder %s73, %s75
      %p79 = scmp.eq.s32.totalorder %s18, 0
      %p80 = por %p78, %p79
      %p81 = scmp.ne.s32.totalorder %s73, %s75
      %p82 = scmp.eq.s32.totalorder %s23, 1
      %p83 = por %p81, %p82
      %p84 = scmp.ne.s32.totalorder %s75, %s76
      %p85 = scmp.eq.s32.totalorder %s23, 0
      %p86 = por %p84, %p85
      %p87 = scmp.ne.s32.totalorder %s75, %s76
      %p88 = scmp.eq.s32.totalorder %s24, 1
      %p89 = por %p87, %p88
      %p91 = scmp.ne.s32.totalorder %s76, %s90
      %p92 = scmp.eq.s32.totalorder %s24, 0
      %p93 = por %p91, %p92
      %s95 = sadd.s32 %s94, 1
      %p98 = scmp.eq.s32.totalorder %s18, 1
      %p99 = scmp.ne.s32.totalorder %s94, %s96
      %p100 = scmp.eq.s32.totalorder %s18, 0
      %p101 = por %p99, %p100
      %p102 = scmp.ne.s32.totalorder %s94, %s96
      %p103 = scmp.eq.s32.totalorder %s23, 1
      %p104 = por %p102, %p103
      %p105 = scmp.ne.s32.totalorder %s96, %s97
      %p106 = scmp.eq.s32.totalorder %s23, 0
      %p107 = por %p105, %p106
      %p108 = scmp.ne.s32.totalorder %s96, %s97
      %p109 = scmp.eq.s32.totalorder %s24, 1
      %p110 = por %p108, %p109
      %p112 = scmp.ne.s32.totalorder %s97, %s111
      %p113 = scmp.eq.s32.totalorder %s24, 0
      %p114 = por %p112, %p113
      %s116 = sadd.s32 %s115, 1
      %p119 = scmp.eq.s32.totalorder %s18, 1
      %p120 = scmp.ne.s32.totalorder %s115, %s117
      %p121 = scmp.eq.s32.totalorder %s18, 0
      %p122 = por %p120, %p121
      %p123 = scmp.ne.s32.totalorder %s115, %s117
      %p124 = scmp.eq.s32.totalorder %s23, 1
      %p125 = por %p123, %p124
      %p126 = scmp.ne.s32.totalorder %s117, %s118
      %p127 = scmp.eq.s32.totalorder %s23, 0
      %p128 = por %p126, %p127
      %p129 = scmp.ne.s32.totalorder %s117, %s118
      %p130 = scmp.eq.s32.totalorder %s24, 1
      %p131 = por %p129, %p130
      %p133 = scmp.ne.s32.totalorder %s118, %s132
      %p134 = scmp.eq.s32.totalorder %s24, 0
      %p135 = por %p133, %p134
      %s137 = sadd.s32 %s136, 1
      %p140 = scmp.eq.s32.totalorder %s18, 1
      %p141 = scmp.ne.s32.totalorder %s136, %s138
      %p142 = scmp.eq.s32.totalorder %s18, 0
      %p143 = por %p141, %p142
      %p144 = scmp.ne.s32.totalorder %s136, %s138
      %p145 = scmp.eq.s32.totalorder %s23, 1
      %p146 = por %p144, %p145
      %p147 = scmp.ne.s32.totalorder %s138, %s139
      %p148 = scmp.eq.s32.totalorder %s23, 0
      %p149 = por %p147, %p148
      %p150 = scmp.ne.s32.totalorder %s138, %s139
      %p151 = scmp.eq.s32.totalorder %s24, 1
      %p152 = por %p150, %p151
      %p154 = scmp.ne.s32.totalorder %s139, %s153
      %p155 = scmp.eq.s32.totalorder %s24, 0
      %p156 = por %p154, %p155
      %s158 = sadd.s32 %s157, 1
      %p161 = scmp.eq.s32.totalorder %s18, 1
      %p162 = scmp.ne.s32.totalorder %s157, %s159
      %p163 = scmp.eq.s32.totalorder %s18, 0
      %p164 = por %p162, %p163
      %p165 = scmp.ne.s32.totalorder %s157, %s159
      %p166 = scmp.eq.s32.totalorder %s23, 1
      %p167 = por %p165, %p166
      %p168 = scmp.ne.s32.totalorder %s159, %s160
      %p169 = scmp.eq.s32.totalorder %s23, 0
      %p170 = por %p168, %p169
      %p171 = scmp.ne.s32.totalorder %s159, %s160
      %p172 = scmp.eq.s32.totalorder %s24, 1
      %p173 = por %p171, %p172
      %p175 = scmp.ne.s32.totalorder %s160, %s174
      %p176 = scmp.eq.s32.totalorder %s24, 0
      %p177 = por %p175, %p176
      %p178 = scmp.le.s32.totalorder 1, %s18
      %p179 = scmp.lt.s32.totalorder %s18, 3
      %p180 = pnand %p178, %p179
      %p181 = pneg %p180
      // Predicated region
      $region9: #{tpu_custom_call.1} parent=5 // pred_check
        _
      $region10: #{tpu_custom_call.1} parent=5 // pred_check_branch
        %183 = sbr.rel (%p180) target = $region12
      $region11: #{tpu_custom_call.1} parent=5 // pred_region
        %s184 = ssub.s32 %s18, 1
        // Predicated region
        $region13: #{tpu_custom_call.1} parent=11 // pred_check
          %p185 = pneg %p65
        $region14: #{tpu_custom_call.1} parent=11 // pred_check_branch
          %187 = sbr.rel (%p185) target = $region16
        $region15: #{tpu_custom_call.1} parent=11 // pred_region
          %s189 = ssub.s32 2048, 2048
          %190 = vsyncadd [#allocation8], %s189
          %s191 = sshll.u32 [#allocation7], 4
          %s192 = int_to_ptr.vmem [resolvable:$true] %s191
          %197 = dma.hbm_to_vmem [thread:$0]  %s1, 2048, %s192, [#allocation8], 64, 64, 4
        $region16: #{tpu_custom_call.1} parent=11 // pred_fallthru
          _
        // Predicated region
        $region17: #{tpu_custom_call.1} parent=11 // pred_check
          %p198 = pneg %p86
        $region18: #{tpu_custom_call.1} parent=11 // pred_check_branch
          %200 = sbr.rel (%p198) target = $region20
        $region19: #{tpu_custom_call.1} parent=11 // pred_region
          %s202 = ssub.s32 2048, 2048
          %203 = vsyncadd [#allocation8], %s202
          %s204 = sshll.u32 [#allocation9], 4
          %s205 = int_to_ptr.vmem [resolvable:$true] %s204
          %210 = dma.hbm_to_vmem [thread:$0]  %s2, 2048, %s205, [#allocation8], 64, 64, 4
        $region20: #{tpu_custom_call.1} parent=11 // pred_fallthru
          _
        // Predicated region
        $region21: #{tpu_custom_call.1} parent=11 // pred_check
          %p211 = pneg %p107
        $region22: #{tpu_custom_call.1} parent=11 // pred_check_branch
          %213 = sbr.rel (%p211) target = $region24
        $region23: #{tpu_custom_call.1} parent=11 // pred_region
          _
        $region24: #{tpu_custom_call.1} parent=11 // pred_fallthru
          _
        // Predicated region
        $region25: #{tpu_custom_call.1} parent=11 // pred_check
          %p214 = pneg %p128
        $region26: #{tpu_custom_call.1} parent=11 // pred_check_branch
          %216 = sbr.rel (%p214) target = $region28
        $region27: #{tpu_custom_call.1} parent=11 // pred_region
          %s218 = ssub.s32 2048, 2048
          %219 = vsyncadd [#allocation11], %s218
          %s220 = sshll.u32 [#allocation10], 4
          %s221 = int_to_ptr.vmem [resolvable:$true] %s220
          %226 = dma.hbm_to_vmem [thread:$0]  %s4, 2048, %s221, [#allocation11], 128, 128, 8
        $region28: #{tpu_custom_call.1} parent=11 // pred_fallthru
          _
        // Predicated region
        $region29: #{tpu_custom_call.1} parent=11 // pred_check
          %p227 = pneg %p149
        $region30: #{tpu_custom_call.1} parent=11 // pred_check_branch
          %229 = sbr.rel (%p227) target = $region32
        $region31: #{tpu_custom_call.1} parent=11 // pred_region
          _
        $region32: #{tpu_custom_call.1} parent=11 // pred_fallthru
          _
      $region12: #{tpu_custom_call.1} parent=5 // pred_fallthru
        _
      %p230 = scmp.lt.s32.totalorder %s18, 2
      // Predicated region
      $region33: #{tpu_custom_call.1} parent=5 // pred_check
        %p231 = pneg %p230
      $region34: #{tpu_custom_call.1} parent=5 // pred_check_branch
        %233 = sbr.rel (%p231) target = $region36
      $region35: #{tpu_custom_call.1} parent=5 // pred_region
        // Predicated region
        $region37: #{tpu_custom_call.1} parent=35 // pred_check
          %p234 = pneg %p38
        $region38: #{tpu_custom_call.1} parent=35 // pred_check_branch
          %236 = sbr.rel (%p234) target = $region40
        $region39: #{tpu_custom_call.1} parent=35 // pred_region
          %s237 = sand.u32 %s28, 1
          %s238 = scalar_lea.sflag [#allocation5], %s237
          %s239 = sand.u32 %s28, 1
          %s240 = smul.addr %s239, 64
          %s241 = scalar_lea.vmem [#allocation4], %s240
          %s242 = smul.u32 8, %s18
          %s244 = ssub.s32 1024, 1024
          %245 = vsyncadd %s238, %s244
          %s246 = smul.addr %s242, 128
          %s247 = scalar_lea.hbm %s0, %s246
          %s248 = sshll.u32 %s241, 4
          %s249 = int_to_ptr.vmem [resolvable:$true] %s248
          %254 = dma.hbm_to_vmem [thread:$0]  %s247, 1024, %s249, %s238, 128, 128, 8
        $region40: #{tpu_custom_call.1} parent=35 // pred_fallthru
          _
      $region36: #{tpu_custom_call.1} parent=5 // pred_fallthru
        _
      %p255 = scmp.le.s32.totalorder 1, %s18
      %p256 = scmp.lt.s32.totalorder %s18, 3
      %p257 = pnand %p255, %p256
      %p258 = pneg %p257
      // Predicated region
      $region41: #{tpu_custom_call.1} parent=5 // pred_check
        _
      $region42: #{tpu_custom_call.1} parent=5 // pred_check_branch
        %260 = sbr.rel (%p257) target = $region44
      $region43: #{tpu_custom_call.1} parent=5 // pred_region
        %s261 = ssub.s32 %s18, 1
        %s262 = sand.u32 %s31, 1
        %s263 = scalar_lea.sflag [#allocation5], %s262
        %s264 = sand.u32 %s31, 1
        %s265 = smul.addr %s264, 64
        %s266 = scalar_lea.vmem [#allocation4], %s265
        // Predicated region
        $region45: #{tpu_custom_call.1} parent=43 // pred_check
          %p267 = pneg %p44
        $region46: #{tpu_custom_call.1} parent=43 // pred_check_branch
          %269 = sbr.rel (%p267) target = $region48
        $region47: #{tpu_custom_call.1} parent=43 // pred_region
          %270 = dma.done %s263, 1024
        $region48: #{tpu_custom_call.1} parent=43 // pred_fallthru
          _
        // Predicated region
        $region49: #{tpu_custom_call.1} parent=43 // pred_check
          %p271 = pneg %p65
        $region50: #{tpu_custom_call.1} parent=43 // pred_check_branch
          %273 = sbr.rel (%p271) target = $region52
        $region51: #{tpu_custom_call.1} parent=43 // pred_region
          %274 = dma.done [#allocation8], 2048
        $region52: #{tpu_custom_call.1} parent=43 // pred_fallthru
          _
        // Predicated region
        $region53: #{tpu_custom_call.1} parent=43 // pred_check
          %p275 = pneg %p86
        $region54: #{tpu_custom_call.1} parent=43 // pred_check_branch
          %277 = sbr.rel (%p275) target = $region56
        $region55: #{tpu_custom_call.1} parent=43 // pred_region
          %278 = dma.done [#allocation8], 2048
        $region56: #{tpu_custom_call.1} parent=43 // pred_fallthru
          _
        // Predicated region
        $region57: #{tpu_custom_call.1} parent=43 // pred_check
          %p279 = pneg %p128
        $region58: #{tpu_custom_call.1} parent=43 // pred_check_branch
          %281 = sbr.rel (%p279) target = $region60
        $region59: #{tpu_custom_call.1} parent=43 // pred_region
          %282 = dma.done [#allocation11], 2048
        $region60: #{tpu_custom_call.1} parent=43 // pred_fallthru
          _
        %s283 = sand.u32 %s31, 1
        %s284 = scalar_lea.sflag [#allocation5], %s283
        %s285 = sand.u32 %s31, 1
        %s286 = smul.addr %s285, 64
        %s287 = scalar_lea.vmem [#allocation4], %s286
        %p288 = pneg %p44
        %p289 = pneg %p41
        %p290 = pneg %p65
        %p291 = pneg %p62
        %p292 = pneg %p86
        %p293 = pneg %p83
        %p294 = pneg %p107
        %p295 = pneg %p104
        %p296 = pneg %p128
        %p297 = pneg %p125
        %p298 = pneg %p149
        %p299 = pneg %p146
        %p300 = pneg %p170
        %p301 = pneg %p167
        %s302 = smul.u32 8, %s23
        %p304 = scmp.eq.s32.totalorder %s23, 0
        // Predicated region
        $region61: #{tpu_custom_call.1} parent=43 // pred_check
          %p305 = pneg %p304
        $region62: #{tpu_custom_call.1} parent=43 // pred_check_branch
          %307 = sbr.rel (%p305) target = $region64
        $region63: #{tpu_custom_call.1} parent=43 // pred_region
          %308 = vst [vmem:[#allocation2] sm:$0xff] 0.0
          %309 = vst [vmem:[#allocation2 + $0x8] sm:$0xff] 0.0
        $region64: #{tpu_custom_call.1} parent=43 // pred_fallthru
          _
        %v310 = vld [vmem:[%s266] sm:$0xff]
        %v311 = vld [vmem:[%s266 + $0x8] sm:$0xff]
        %v312 = vld [vmem:[%s266 + $0x10] sm:$0xff]
        %v313 = vld [vmem:[%s266 + $0x18] sm:$0xff]
        %v314 = vld [vmem:[%s266 + $0x20] sm:$0xff]
        %v315 = vld [vmem:[%s266 + $0x28] sm:$0xff]
        %v316 = vld [vmem:[%s266 + $0x30] sm:$0xff]
        %v317 = vld [vmem:[%s266 + $0x38] sm:$0xff]
        %v318 = vpack.c.bf16 %v311, %v310
        %v319 = vpack.c.bf16 %v313, %v312
        %v320 = vpack.c.bf16 %v315, %v314
        %v321 = vpack.c.bf16 %v317, %v316
        %v322 = vld [vmem:[#allocation7] sm:$0xf]
        %v323 = vld [vmem:[#allocation7 + $0x4] sm:$0xf]
        %v324 = vld [vmem:[#allocation7 + $0x8] sm:$0xf]
        %v325 = vld [vmem:[#allocation7 + $0xc] sm:$0xf]
        %v326 = vld [vmem:[#allocation7 + $0x10] sm:$0xf]
        %v327 = vld [vmem:[#allocation7 + $0x14] sm:$0xf]
        %v328 = vld [vmem:[#allocation7 + $0x18] sm:$0xf]
        %v329 = vld [vmem:[#allocation7 + $0x1c] sm:$0xf]
        %v330 = vld [vmem:[#allocation7 + $0x20] sm:$0xf]
        %v331 = vld [vmem:[#allocation7 + $0x24] sm:$0xf]
        %v332 = vld [vmem:[#allocation7 + $0x28] sm:$0xf]
        %v333 = vld [vmem:[#allocation7 + $0x2c] sm:$0xf]
        %v334 = vld [vmem:[#allocation7 + $0x30] sm:$0xf]
        %v335 = vld [vmem:[#allocation7 + $0x34] sm:$0xf]
        %v336 = vld [vmem:[#allocation7 + $0x38] sm:$0xf]
        %v337 = vld [vmem:[#allocation7 + $0x3c] sm:$0xf]
        %v338 = vld [vmem:[%s3] sm:$0x1]
        %v340 = vlaneseq
        %v341 = vshrl.u32 %v340, 7
        %v342 = vsub.s32 0, %v341
        %v343 = vrot.slane %v338, %v342
        %v361 = vunpack.c.l.b16 %v322
        %v362 = vunpack.c.l.b16 %v323
        %v363 = vunpack.c.l.b16 %v324
        %v364 = vunpack.c.l.b16 %v325
        %v365 = vunpack.c.l.b16 %v326
        %v366 = vunpack.c.l.b16 %v327
        %v367 = vunpack.c.l.b16 %v328
        %v368 = vunpack.c.l.b16 %v329
        %v369 = vunpack.c.l.b16 %v330
        %v370 = vunpack.c.l.b16 %v331
        %v371 = vunpack.c.l.b16 %v332
        %v372 = vunpack.c.l.b16 %v333
        %v373 = vunpack.c.l.b16 %v334
        %v374 = vunpack.c.l.b16 %v335
        %v375 = vunpack.c.l.b16 %v336
        %v376 = vunpack.c.l.b16 %v337
        %v377 = vpack.c.b16 %v362, %v361
        %v378 = vpack.c.b16 %v364, %v363
        %v379 = vpack.c.b16 %v366, %v365
        %v380 = vpack.c.b16 %v368, %v367
        %v381 = vpack.c.b16 %v370, %v369
        %v382 = vpack.c.b16 %v372, %v371
        %v383 = vpack.c.b16 %v374, %v373
        %v384 = vpack.c.b16 %v376, %v375
        %393 = vmatprep.subr.bf16.mxu0 0
        %394 = vmatpush1.bf16.msra.mxu0 %v377
        %395 = vmatprep.subr.bf16.mxu0 0
        %396 = vmatpush1.bf16.msra.mxu0 %v378
        %397 = vmatprep.subr.bf16.mxu0 0
        %398 = vmatpush1.bf16.msra.mxu0 %v379
        %399 = vmatprep.subr.bf16.mxu0 0
        %400 = vmatpush1.bf16.msra.mxu0 %v380
        %401 = vmatprep.subr.bf16.mxu0 0
        %402 = vmatpush1.bf16.msra.mxu0 %v381
        %403 = vmatprep.subr.bf16.mxu0 0
        %404 = vmatpush1.bf16.msra.mxu0 %v382
        %405 = vmatprep.subr.bf16.mxu0 0
        %406 = vmatpush1.bf16.msra.mxu0 %v383
        %407 = vmatprep.subr.bf16.mxu0 0
        %408 = vmatpush1.bf16.msra.mxu0 %v384
        %409 = vmatprep.subr.bf16.mxu0 0
        %410 = vmatpush1.bf16.msra.mxu0 0
        %411 = vmatprep.subr.bf16.mxu0 0
        %412 = vmatpush1.bf16.msra.mxu0 0
        %413 = vmatprep.subr.bf16.mxu0 0
        %414 = vmatpush1.bf16.msra.mxu0 0
        %415 = vmatprep.subr.bf16.mxu0 0
        %416 = vmatpush1.bf16.msra.mxu0 0
        %417 = vmatprep.subr.bf16.mxu0 0
        %418 = vmatpush1.bf16.msra.mxu0 0
        %419 = vmatprep.subr.bf16.mxu0 0
        %420 = vmatpush1.bf16.msra.mxu0 0
        %421 = vmatprep.subr.bf16.mxu0 0
        %422 = vmatpush1.bf16.msra.mxu0 0
        %423 = vmatprep.subr.bf16.mxu0 0
        %424 = vmatpush1.bf16.msra.mxu0 0
        %425 = vmatprep.mubr.bf16.mxu0 0
        %426 = vmatmul.mubr.bf16.gmra.mrb[0].mxu0 %v318
        %v427 = vpop.f32.mrb[0].mxu0
        %v428 = vadd.f32 %v343, %v427
        %v429 = vpop.f32.mrb[0].mxu0
        %v430 = vpop.f32.mrb[0].mxu0
        %v431 = vadd.f32 %v343, %v430
        %v432 = vpop.f32.mrb[0].mxu0
        %433 = vmatprep.mubr.bf16.mxu0 0
        %434 = vmatmul.mubr.bf16.gmra.mrb[0].mxu0 %v319
        %v435 = vpop.f32.mrb[0].mxu0
        %v436 = vadd.f32 %v343, %v435
        %v437 = vpop.f32.mrb[0].mxu0
        %v438 = vpop.f32.mrb[0].mxu0
        %v439 = vadd.f32 %v343, %v438
        %v440 = vpop.f32.mrb[0].mxu0
        %441 = vmatprep.mubr.bf16.mxu0 0
        %442 = vmatmul.mubr.bf16.gmra.mrb[0].mxu0 %v320
        %v443 = vpop.f32.mrb[0].mxu0
        %v444 = vadd.f32 %v343, %v443
        %v445 = vpop.f32.mrb[0].mxu0
        %v446 = vpop.f32.mrb[0].mxu0
        %v447 = vadd.f32 %v343, %v446
        %v448 = vpop.f32.mrb[0].mxu0
        %449 = vmatprep.mubr.bf16.mxu0 0
        %450 = vmatmul.mubr.bf16.gmra.mrb[0].mxu0 %v321
        %v451 = vpop.f32.mrb[0].mxu0
        %v452 = vadd.f32 %v343, %v451
        %v453 = vpop.f32.mrb[0].mxu0
        %v454 = vpop.f32.mrb[0].mxu0
        %v455 = vadd.f32 %v343, %v454
        %v456 = vpop.f32.mrb[0].mxu0
        %457 = vdwg.mxu0
        %v458 = vld [vmem:[#allocation9] sm:$0xf]
        %v459 = vld [vmem:[#allocation9 + $0x4] sm:$0xf]
        %v460 = vld [vmem:[#allocation9 + $0x8] sm:$0xf]
        %v461 = vld [vmem:[#allocation9 + $0xc] sm:$0xf]
        %v462 = vld [vmem:[#allocation9 + $0x10] sm:$0xf]
        %v463 = vld [vmem:[#allocation9 + $0x14] sm:$0xf]
        %v464 = vld [vmem:[#allocation9 + $0x18] sm:$0xf]
        %v465 = vld [vmem:[#allocation9 + $0x1c] sm:$0xf]
        %v466 = vld [vmem:[#allocation9 + $0x20] sm:$0xf]
        %v467 = vld [vmem:[#allocation9 + $0x24] sm:$0xf]
        %v468 = vld [vmem:[#allocation9 + $0x28] sm:$0xf]
        %v469 = vld [vmem:[#allocation9 + $0x2c] sm:$0xf]
        %v470 = vld [vmem:[#allocation9 + $0x30] sm:$0xf]
        %v471 = vld [vmem:[#allocation9 + $0x34] sm:$0xf]
        %v472 = vld [vmem:[#allocation9 + $0x38] sm:$0xf]
        %v473 = vld [vmem:[#allocation9 + $0x3c] sm:$0xf]
        %v474 = vld [vmem:[#allocation2] sm:$0xff]
        %v475 = vpack.c.bf16 %v474, %v474
        %v492 = vunpack.c.l.b16 %v458
        %v493 = vunpack.c.l.b16 %v459
        %v494 = vunpack.c.l.b16 %v460
        %v495 = vunpack.c.l.b16 %v461
        %v496 = vunpack.c.l.b16 %v462
        %v497 = vunpack.c.l.b16 %v463
        %v498 = vunpack.c.l.b16 %v464
        %v499 = vunpack.c.l.b16 %v465
        %v500 = vunpack.c.l.b16 %v466
        %v501 = vunpack.c.l.b16 %v467
        %v502 = vunpack.c.l.b16 %v468
        %v503 = vunpack.c.l.b16 %v469
        %v504 = vunpack.c.l.b16 %v470
        %v505 = vunpack.c.l.b16 %v471
        %v506 = vunpack.c.l.b16 %v472
        %v507 = vunpack.c.l.b16 %v473
        %v508 = vpack.c.b16 %v493, %v492
        %v509 = vpack.c.b16 %v495, %v494
        %v510 = vpack.c.b16 %v497, %v496
        %v511 = vpack.c.b16 %v499, %v498
        %v512 = vpack.c.b16 %v501, %v500
        %v513 = vpack.c.b16 %v503, %v502
        %v514 = vpack.c.b16 %v505, %v504
        %v515 = vpack.c.b16 %v507, %v506
        %524 = vmatprep.subr.bf16.mxu0 0
        %525 = vmatpush1.bf16.msra.mxu0 %v508
        %526 = vmatprep.subr.bf16.mxu0 0
        %527 = vmatpush1.bf16.msra.mxu0 %v509
        %528 = vmatprep.subr.bf16.mxu0 0
        %529 = vmatpush1.bf16.msra.mxu0 %v510
        %530 = vmatprep.subr.bf16.mxu0 0
        %531 = vmatpush1.bf16.msra.mxu0 %v511
        %532 = vmatprep.subr.bf16.mxu0 0
        %533 = vmatpush1.bf16.msra.mxu0 %v512
        %534 = vmatprep.subr.bf16.mxu0 0
        %535 = vmatpush1.bf16.msra.mxu0 %v513
        %536 = vmatprep.subr.bf16.mxu0 0
        %537 = vmatpush1.bf16.msra.mxu0 %v514
        %538 = vmatprep.subr.bf16.mxu0 0
        %539 = vmatpush1.bf16.msra.mxu0 %v515
        %540 = vmatprep.subr.bf16.mxu0 0
        %541 = vmatpush1.bf16.msra.mxu0 0
        %542 = vmatprep.subr.bf16.mxu0 0
        %543 = vmatpush1.bf16.msra.mxu0 0
        %544 = vmatprep.subr.bf16.mxu0 0
        %545 = vmatpush1.bf16.msra.mxu0 0
        %546 = vmatprep.subr.bf16.mxu0 0
        %547 = vmatpush1.bf16.msra.mxu0 0
        %548 = vmatprep.subr.bf16.mxu0 0
        %549 = vmatpush1.bf16.msra.mxu0 0
        %550 = vmatprep.subr.bf16.mxu0 0
        %551 = vmatpush1.bf16.msra.mxu0 0
        %552 = vmatprep.subr.bf16.mxu0 0
        %553 = vmatpush1.bf16.msra.mxu0 0
        %554 = vmatprep.subr.bf16.mxu0 0
        %555 = vmatpush1.bf16.msra.mxu0 0
        %556 = vmatprep.mubr.bf16.mxu0 0
        %557 = vmatmul.mubr.bf16.gmra.mrb[0].mxu0 %v475
        %v558 = vpop.f32.mrb[0].mxu0
        %v559 = vadd.f32 0.0, %v558
        %v560 = vpop.f32.mrb[0].mxu0
        %v561 = vpop.f32.mrb[0].mxu0
        %v562 = vpop.f32.mrb[0].mxu0
        %563 = vdwg.mxu0
        %v564 = vadd.f32 %v428, %v559
        %v565 = vtanh.pop %v564
        %566 = vst [vmem:[#allocation3] sm:$0xff] %v565
        %v567 = vpack.c.bf16 %v565, %v565
        %568 = vmatprep.subr.bf16.mxu0 0
        %569 = vmatpush1.bf16.msra.mxu0 %v508
        %570 = vmatprep.subr.bf16.mxu0 0
        %571 = vmatpush1.bf16.msra.mxu0 %v509
        %572 = vmatprep.subr.bf16.mxu0 0
        %573 = vmatpush1.bf16.msra.mxu0 %v510
        %574 = vmatprep.subr.bf16.mxu0 0
        %575 = vmatpush1.bf16.msra.mxu0 %v511
        %576 = vmatprep.subr.bf16.mxu0 0
        %577 = vmatpush1.bf16.msra.mxu0 %v512
        %578 = vmatprep.subr.bf16.mxu0 0
        %579 = vmatpush1.bf16.msra.mxu0 %v513
        %580 = vmatprep.subr.bf16.mxu0 0
        %581 = vmatpush1.bf16.msra.mxu0 %v514
        %582 = vmatprep.subr.bf16.mxu0 0
        %583 = vmatpush1.bf16.msra.mxu0 %v515
        %584 = vmatprep.subr.bf16.mxu0 0
        %585 = vmatpush1.bf16.msra.mxu0 0
        %586 = vmatprep.subr.bf16.mxu0 0
        %587 = vmatpush1.bf16.msra.mxu0 0
        %588 = vmatprep.subr.bf16.mxu0 0
        %589 = vmatpush1.bf16.msra.mxu0 0
        %590 = vmatprep.subr.bf16.mxu0 0
        %591 = vmatpush1.bf16.msra.mxu0 0
        %592 = vmatprep.subr.bf16.mxu0 0
        %593 = vmatpush1.bf16.msra.mxu0 0
        %594 = vmatprep.subr.bf16.mxu0 0
        %595 = vmatpush1.bf16.msra.mxu0 0
        %596 = vmatprep.subr.bf16.mxu0 0
        %597 = vmatpush1.bf16.msra.mxu0 0
        %598 = vmatprep.subr.bf16.mxu0 0
        %599 = vmatpush1.bf16.msra.mxu0 0
        %600 = vmatprep.mubr.bf16.mxu0 0
        %601 = vmatmul.mubr.bf16.gmra.mrb[0].mxu0 %v567
        %v602 = vpop.f32.mrb[0].mxu0
        %v603 = vadd.f32 0.0, %v602
        %v604 = vpop.f32.mrb[0].mxu0
        %v605 = vpop.f32.mrb[0].mxu0
        %v606 = vpop.f32.mrb[0].mxu0
        %607 = vdwg.mxu0
        %v608 = vadd.f32 %v431, %v603
        %v609 = vtanh.pop %v608
        %s610 = scalar_lea.vmem [#allocation3], 8
        %611 = vst [vmem:[%s610] sm:$0xff] %v609
        %v612 = vpack.c.bf16 %v609, %v609
        %613 = vmatprep.subr.bf16.mxu0 0
        %614 = vmatpush1.bf16.msra.mxu0 %v508
        %615 = vmatprep.subr.bf16.mxu0 0
        %616 = vmatpush1.bf16.msra.mxu0 %v509
        %617 = vmatprep.subr.bf16.mxu0 0
        %618 = vmatpush1.bf16.msra.mxu0 %v510
        %619 = vmatprep.subr.bf16.mxu0 0
        %620 = vmatpush1.bf16.msra.mxu0 %v511
        %621 = vmatprep.subr.bf16.mxu0 0
        %622 = vmatpush1.bf16.msra.mxu0 %v512
        %623 = vmatprep.subr.bf16.mxu0 0
        %624 = vmatpush1.bf16.msra.mxu0 %v513
        %625 = vmatprep.subr.bf16.mxu0 0
        %626 = vmatpush1.bf16.msra.mxu0 %v514
        %627 = vmatprep.subr.bf16.mxu0 0
        %628 = vmatpush1.bf16.msra.mxu0 %v515
        %629 = vmatprep.subr.bf16.mxu0 0
        %630 = vmatpush1.bf16.msra.mxu0 0
        %631 = vmatprep.subr.bf16.mxu0 0
        %632 = vmatpush1.bf16.msra.mxu0 0
        %633 = vmatprep.subr.bf16.mxu0 0
        %634 = vmatpush1.bf16.msra.mxu0 0
        %635 = vmatprep.subr.bf16.mxu0 0
        %636 = vmatpush1.bf16.msra.mxu0 0
        %637 = vmatprep.subr.bf16.mxu0 0
        %638 = vmatpush1.bf16.msra.mxu0 0
        %639 = vmatprep.subr.bf16.mxu0 0
        %640 = vmatpush1.bf16.msra.mxu0 0
        %641 = vmatprep.subr.bf16.mxu0 0
        %642 = vmatpush1.bf16.msra.mxu0 0
        %643 = vmatprep.subr.bf16.mxu0 0
        %644 = vmatpush1.bf16.msra.mxu0 0
        %645 = vmatprep.mubr.bf16.mxu0 0
        %646 = vmatmul.mubr.bf16.gmra.mrb[0].mxu0 %v612
        %v647 = vpop.f32.mrb[0].mxu0
        %v648 = vadd.f32 0.0, %v647
        %v649 = vpop.f32.mrb[0].mxu0
        %v650 = vpop.f32.mrb[0].mxu0
        %v651 = vpop.f32.mrb[0].mxu0
        %652 = vdwg.mxu0
        %v653 = vadd.f32 %v436, %v648
        %v654 = vtanh.pop %v653
        %s655 = scalar_lea.vmem [#allocation3], 16
        %656 = vst [vmem:[%s655] sm:$0xff] %v654
        %v657 = vpack.c.bf16 %v654, %v654
        %658 = vmatprep.subr.bf16.mxu0 0
        %659 = vmatpush1.bf16.msra.mxu0 %v508
        %660 = vmatprep.subr.bf16.mxu0 0
        %661 = vmatpush1.bf16.msra.mxu0 %v509
        %662 = vmatprep.subr.bf16.mxu0 0
        %663 = vmatpush1.bf16.msra.mxu0 %v510
        %664 = vmatprep.subr.bf16.mxu0 0
        %665 = vmatpush1.bf16.msra.mxu0 %v511
        %666 = vmatprep.subr.bf16.mxu0 0
        %667 = vmatpush1.bf16.msra.mxu0 %v512
        %668 = vmatprep.subr.bf16.mxu0 0
        %669 = vmatpush1.bf16.msra.mxu0 %v513
        %670 = vmatprep.subr.bf16.mxu0 0
        %671 = vmatpush1.bf16.msra.mxu0 %v514
        %672 = vmatprep.subr.bf16.mxu0 0
        %673 = vmatpush1.bf16.msra.mxu0 %v515
        %674 = vmatprep.subr.bf16.mxu0 0
        %675 = vmatpush1.bf16.msra.mxu0 0
        %676 = vmatprep.subr.bf16.mxu0 0
        %677 = vmatpush1.bf16.msra.mxu0 0
        %678 = vmatprep.subr.bf16.mxu0 0
        %679 = vmatpush1.bf16.msra.mxu0 0
        %680 = vmatprep.subr.bf16.mxu0 0
        %681 = vmatpush1.bf16.msra.mxu0 0
        %682 = vmatprep.subr.bf16.mxu0 0
        %683 = vmatpush1.bf16.msra.mxu0 0
        %684 = vmatprep.subr.bf16.mxu0 0
        %685 = vmatpush1.bf16.msra.mxu0 0
        %686 = vmatprep.subr.bf16.mxu0 0
        %687 = vmatpush1.bf16.msra.mxu0 0
        %688 = vmatprep.subr.bf16.mxu0 0
        %689 = vmatpush1.bf16.msra.mxu0 0
        %690 = vmatprep.mubr.bf16.mxu0 0
        %691 = vmatmul.mubr.bf16.gmra.mrb[0].mxu0 %v657
        %v692 = vpop.f32.mrb[0].mxu0
        %v693 = vadd.f32 0.0, %v692
        %v694 = vpop.f32.mrb[0].mxu0
        %v695 = vpop.f32.mrb[0].mxu0
        %v696 = vpop.f32.mrb[0].mxu0
        %697 = vdwg.mxu0
        %v698 = vadd.f32 %v439, %v693
        %v699 = vtanh.pop %v698
        %s700 = scalar_lea.vmem [#allocation3], 24
        %701 = vst [vmem:[%s700] sm:$0xff] %v699
        %v702 = vpack.c.bf16 %v699, %v699
        %703 = vmatprep.subr.bf16.mxu0 0
        %704 = vmatpush1.bf16.msra.mxu0 %v508
        %705 = vmatprep.subr.bf16.mxu0 0
        %706 = vmatpush1.bf16.msra.mxu0 %v509
        %707 = vmatprep.subr.bf16.mxu0 0
        %708 = vmatpush1.bf16.msra.mxu0 %v510
        %709 = vmatprep.subr.bf16.mxu0 0
        %710 = vmatpush1.bf16.msra.mxu0 %v511
        %711 = vmatprep.subr.bf16.mxu0 0
        %712 = vmatpush1.bf16.msra.mxu0 %v512
        %713 = vmatprep.subr.bf16.mxu0 0
        %714 = vmatpush1.bf16.msra.mxu0 %v513
        %715 = vmatprep.subr.bf16.mxu0 0
        %716 = vmatpush1.bf16.msra.mxu0 %v514
        %717 = vmatprep.subr.bf16.mxu0 0
        %718 = vmatpush1.bf16.msra.mxu0 %v515
        %719 = vmatprep.subr.bf16.mxu0 0
        %720 = vmatpush1.bf16.msra.mxu0 0
        %721 = vmatprep.subr.bf16.mxu0 0
        %722 = vmatpush1.bf16.msra.mxu0 0
        %723 = vmatprep.subr.bf16.mxu0 0
        %724 = vmatpush1.bf16.msra.mxu0 0
        %725 = vmatprep.subr.bf16.mxu0 0
        %726 = vmatpush1.bf16.msra.mxu0 0
        %727 = vmatprep.subr.bf16.mxu0 0
        %728 = vmatpush1.bf16.msra.mxu0 0
        %729 = vmatprep.subr.bf16.mxu0 0
        %730 = vmatpush1.bf16.msra.mxu0 0
        %731 = vmatprep.subr.bf16.mxu0 0
        %732 = vmatpush1.bf16.msra.mxu0 0
        %733 = vmatprep.subr.bf16.mxu0 0
        %734 = vmatpush1.bf16.msra.mxu0 0
        %735 = vmatprep.mubr.bf16.mxu0 0
        %736 = vmatmul.mubr.bf16.gmra.mrb[0].mxu0 %v702
        %v737 = vpop.f32.mrb[0].mxu0
        %v738 = vadd.f32 0.0, %v737
        %v739 = vpop.f32.mrb[0].mxu0
        %v740 = vpop.f32.mrb[0].mxu0
        %v741 = vpop.f32.mrb[0].mxu0
        %742 = vdwg.mxu0
        %v743 = vadd.f32 %v444, %v738
        %v744 = vtanh.pop %v743
        %s745 = scalar_lea.vmem [#allocation3], 32
        %746 = vst [vmem:[%s745] sm:$0xff] %v744
        %v747 = vpack.c.bf16 %v744, %v744
        %748 = vmatprep.subr.bf16.mxu0 0
        %749 = vmatpush1.bf16.msra.mxu0 %v508
        %750 = vmatprep.subr.bf16.mxu0 0
        %751 = vmatpush1.bf16.msra.mxu0 %v509
        %752 = vmatprep.subr.bf16.mxu0 0
        %753 = vmatpush1.bf16.msra.mxu0 %v510
        %754 = vmatprep.subr.bf16.mxu0 0
        %755 = vmatpush1.bf16.msra.mxu0 %v511
        %756 = vmatprep.subr.bf16.mxu0 0
        %757 = vmatpush1.bf16.msra.mxu0 %v512
        %758 = vmatprep.subr.bf16.mxu0 0
        %759 = vmatpush1.bf16.msra.mxu0 %v513
        %760 = vmatprep.subr.bf16.mxu0 0
        %761 = vmatpush1.bf16.msra.mxu0 %v514
        %762 = vmatprep.subr.bf16.mxu0 0
        %763 = vmatpush1.bf16.msra.mxu0 %v515
        %764 = vmatprep.subr.bf16.mxu0 0
        %765 = vmatpush1.bf16.msra.mxu0 0
        %766 = vmatprep.subr.bf16.mxu0 0
        %767 = vmatpush1.bf16.msra.mxu0 0
        %768 = vmatprep.subr.bf16.mxu0 0
        %769 = vmatpush1.bf16.msra.mxu0 0
        %770 = vmatprep.subr.bf16.mxu0 0
        %771 = vmatpush1.bf16.msra.mxu0 0
        %772 = vmatprep.subr.bf16.mxu0 0
        %773 = vmatpush1.bf16.msra.mxu0 0
        %774 = vmatprep.subr.bf16.mxu0 0
        %775 = vmatpush1.bf16.msra.mxu0 0
        %776 = vmatprep.subr.bf16.mxu0 0
        %777 = vmatpush1.bf16.msra.mxu0 0
        %778 = vmatprep.subr.bf16.mxu0 0
        %779 = vmatpush1.bf16.msra.mxu0 0
        %780 = vmatprep.mubr.bf16.mxu0 0
        %781 = vmatmul.mubr.bf16.gmra.mrb[0].mxu0 %v747
        %v782 = vpop.f32.mrb[0].mxu0
        %v783 = vadd.f32 0.0, %v782
        %v784 = vpop.f32.mrb[0].mxu0
        %v785 = vpop.f32.mrb[0].mxu0
        %v786 = vpop.f32.mrb[0].mxu0
        %787 = vdwg.mxu0
        %v788 = vadd.f32 %v447, %v783
        %v789 = vtanh.pop %v788
        %s790 = scalar_lea.vmem [#allocation3], 40
        %791 = vst [vmem:[%s790] sm:$0xff] %v789
        %v792 = vpack.c.bf16 %v789, %v789
        %793 = vmatprep.subr.bf16.mxu0 0
        %794 = vmatpush1.bf16.msra.mxu0 %v508
        %795 = vmatprep.subr.bf16.mxu0 0
        %796 = vmatpush1.bf16.msra.mxu0 %v509
        %797 = vmatprep.subr.bf16.mxu0 0
        %798 = vmatpush1.bf16.msra.mxu0 %v510
        %799 = vmatprep.subr.bf16.mxu0 0
        %800 = vmatpush1.bf16.msra.mxu0 %v511
        %801 = vmatprep.subr.bf16.mxu0 0
        %802 = vmatpush1.bf16.msra.mxu0 %v512
        %803 = vmatprep.subr.bf16.mxu0 0
        %804 = vmatpush1.bf16.msra.mxu0 %v513
        %805 = vmatprep.subr.bf16.mxu0 0
        %806 = vmatpush1.bf16.msra.mxu0 %v514
        %807 = vmatprep.subr.bf16.mxu0 0
        %808 = vmatpush1.bf16.msra.mxu0 %v515
        %809 = vmatprep.subr.bf16.mxu0 0
        %810 = vmatpush1.bf16.msra.mxu0 0
        %811 = vmatprep.subr.bf16.mxu0 0
        %812 = vmatpush1.bf16.msra.mxu0 0
        %813 = vmatprep.subr.bf16.mxu0 0
        %814 = vmatpush1.bf16.msra.mxu0 0
        %815 = vmatprep.subr.bf16.mxu0 0
        %816 = vmatpush1.bf16.msra.mxu0 0
        %817 = vmatprep.subr.bf16.mxu0 0
        %818 = vmatpush1.bf16.msra.mxu0 0
        %819 = vmatprep.subr.bf16.mxu0 0
        %820 = vmatpush1.bf16.msra.mxu0 0
        %821 = vmatprep.subr.bf16.mxu0 0
        %822 = vmatpush1.bf16.msra.mxu0 0
        %823 = vmatprep.subr.bf16.mxu0 0
        %824 = vmatpush1.bf16.msra.mxu0 0
        %825 = vmatprep.mubr.bf16.mxu0 0
        %826 = vmatmul.mubr.bf16.gmra.mrb[0].mxu0 %v792
        %v827 = vpop.f32.mrb[0].mxu0
        %v828 = vadd.f32 0.0, %v827
        %v829 = vpop.f32.mrb[0].mxu0
        %v830 = vpop.f32.mrb[0].mxu0
        %v831 = vpop.f32.mrb[0].mxu0
        %832 = vdwg.mxu0
        %v833 = vadd.f32 %v452, %v828
        %v834 = vtanh.pop %v833
        %s835 = scalar_lea.vmem [#allocation3], 48
        %836 = vst [vmem:[%s835] sm:$0xff] %v834
        %v837 = vpack.c.bf16 %v834, %v834
        %838 = vmatprep.subr.bf16.mxu0 0
        %839 = vmatpush1.bf16.msra.mxu0 %v508
        %840 = vmatprep.subr.bf16.mxu0 0
        %841 = vmatpush1.bf16.msra.mxu0 %v509
        %842 = vmatprep.subr.bf16.mxu0 0
        %843 = vmatpush1.bf16.msra.mxu0 %v510
        %844 = vmatprep.subr.bf16.mxu0 0
        %845 = vmatpush1.bf16.msra.mxu0 %v511
        %846 = vmatprep.subr.bf16.mxu0 0
        %847 = vmatpush1.bf16.msra.mxu0 %v512
        %848 = vmatprep.subr.bf16.mxu0 0
        %849 = vmatpush1.bf16.msra.mxu0 %v513
        %850 = vmatprep.subr.bf16.mxu0 0
        %851 = vmatpush1.bf16.msra.mxu0 %v514
        %852 = vmatprep.subr.bf16.mxu0 0
        %853 = vmatpush1.bf16.msra.mxu0 %v515
        %854 = vmatprep.subr.bf16.mxu0 0
        %855 = vmatpush1.bf16.msra.mxu0 0
        %856 = vmatprep.subr.bf16.mxu0 0
        %857 = vmatpush1.bf16.msra.mxu0 0
        %858 = vmatprep.subr.bf16.mxu0 0
        %859 = vmatpush1.bf16.msra.mxu0 0
        %860 = vmatprep.subr.bf16.mxu0 0
        %861 = vmatpush1.bf16.msra.mxu0 0
        %862 = vmatprep.subr.bf16.mxu0 0
        %863 = vmatpush1.bf16.msra.mxu0 0
        %864 = vmatprep.subr.bf16.mxu0 0
        %865 = vmatpush1.bf16.msra.mxu0 0
        %866 = vmatprep.subr.bf16.mxu0 0
        %867 = vmatpush1.bf16.msra.mxu0 0
        %868 = vmatprep.subr.bf16.mxu0 0
        %869 = vmatpush1.bf16.msra.mxu0 0
        %870 = vmatprep.mubr.bf16.mxu0 0
        %871 = vmatmul.mubr.bf16.gmra.mrb[0].mxu0 %v837
        %v872 = vpop.f32.mrb[0].mxu0
        %v873 = vadd.f32 0.0, %v872
        %v874 = vpop.f32.mrb[0].mxu0
        %v875 = vpop.f32.mrb[0].mxu0
        %v876 = vpop.f32.mrb[0].mxu0
        %877 = vdwg.mxu0
        %v878 = vadd.f32 %v455, %v873
        %v879 = vtanh.pop %v878
        %s880 = scalar_lea.vmem [#allocation3], 56
        %881 = vst [vmem:[%s880] sm:$0xff] %v879
        %882 = vst [vmem:[#allocation2] sm:$0xff] %v879
        %v883 = vld [vmem:[#allocation3] sm:$0xff]
        %v884 = vld [vmem:[#allocation3 + $0x8] sm:$0xff]
        %v885 = vld [vmem:[#allocation3 + $0x10] sm:$0xff]
        %v886 = vld [vmem:[#allocation3 + $0x18] sm:$0xff]
        %v887 = vld [vmem:[#allocation3 + $0x20] sm:$0xff]
        %v888 = vld [vmem:[#allocation3 + $0x28] sm:$0xff]
        %v889 = vld [vmem:[#allocation3 + $0x30] sm:$0xff]
        %v890 = vld [vmem:[#allocation3 + $0x38] sm:$0xff]
        %v891 = vpack.c.bf16 %v884, %v883
        %v892 = vpack.c.bf16 %v886, %v885
        %v893 = vpack.c.bf16 %v888, %v887
        %v894 = vpack.c.bf16 %v890, %v889
        %s895 = scalar_lea.vmem [#allocation7], 64
        %v896 = vld [vmem:[%s895] sm:$0xf]
        %v897 = vld [vmem:[%s895 + $0x4] sm:$0xf]
        %v898 = vld [vmem:[%s895 + $0x8] sm:$0xf]
        %v899 = vld [vmem:[%s895 + $0xc] sm:$0xf]
        %v900 = vld [vmem:[%s895 + $0x10] sm:$0xf]
        %v901 = vld [vmem:[%s895 + $0x14] sm:$0xf]
        %v902 = vld [vmem:[%s895 + $0x18] sm:$0xf]
        %v903 = vld [vmem:[%s895 + $0x1c] sm:$0xf]
        %v904 = vld [vmem:[%s895 + $0x20] sm:$0xf]
        %v905 = vld [vmem:[%s895 + $0x24] sm:$0xf]
        %v906 = vld [vmem:[%s895 + $0x28] sm:$0xf]
        %v907 = vld [vmem:[%s895 + $0x2c] sm:$0xf]
        %v908 = vld [vmem:[%s895 + $0x30] sm:$0xf]
        %v909 = vld [vmem:[%s895 + $0x34] sm:$0xf]
        %v910 = vld [vmem:[%s895 + $0x38] sm:$0xf]
        %v911 = vld [vmem:[%s895 + $0x3c] sm:$0xf]
        %s912 = scalar_lea.vmem %s3, 1
        %v913 = vld [vmem:[%s912] sm:$0x1]
        %v915 = vlaneseq
        %v916 = vshrl.u32 %v915, 7
        %v917 = vsub.s32 0, %v916
        %v918 = vrot.slane %v913, %v917
        %v936 = vunpack.c.l.b16 %v896
        %v937 = vunpack.c.l.b16 %v897
        %v938 = vunpack.c.l.b16 %v898
        %v939 = vunpack.c.l.b16 %v899
        %v940 = vunpack.c.l.b16 %v900
        %v941 = vunpack.c.l.b16 %v901
        %v942 = vunpack.c.l.b16 %v902
        %v943 = vunpack.c.l.b16 %v903
        %v944 = vunpack.c.l.b16 %v904
        %v945 = vunpack.c.l.b16 %v905
        %v946 = vunpack.c.l.b16 %v906
        %v947 = vunpack.c.l.b16 %v907
        %v948 = vunpack.c.l.b16 %v908
        %v949 = vunpack.c.l.b16 %v909
        %v950 = vunpack.c.l.b16 %v910
        %v951 = vunpack.c.l.b16 %v911
        %v952 = vpack.c.b16 %v937, %v936
        %v953 = vpack.c.b16 %v939, %v938
        %v954 = vpack.c.b16 %v941, %v940
        %v955 = vpack.c.b16 %v943, %v942
        %v956 = vpack.c.b16 %v945, %v944
        %v957 = vpack.c.b16 %v947, %v946
        %v958 = vpack.c.b16 %v949, %v948
        %v959 = vpack.c.b16 %v951, %v950
        %968 = vmatprep.subr.bf16.mxu0 0
        %969 = vmatpush1.bf16.msra.mxu0 %v952
        %970 = vmatprep.subr.bf16.mxu0 0
        %971 = vmatpush1.bf16.msra.mxu0 %v953
        %972 = vmatprep.subr.bf16.mxu0 0
        %973 = vmatpush1.bf16.msra.mxu0 %v954
        %974 = vmatprep.subr.bf16.mxu0 0
        %975 = vmatpush1.bf16.msra.mxu0 %v955
        %976 = vmatprep.subr.bf16.mxu0 0
        %977 = vmatpush1.bf16.msra.mxu0 %v956
        %978 = vmatprep.subr.bf16.mxu0 0
        %979 = vmatpush1.bf16.msra.mxu0 %v957
        %980 = vmatprep.subr.bf16.mxu0 0
        %981 = vmatpush1.bf16.msra.mxu0 %v958
        %982 = vmatprep.subr.bf16.mxu0 0
        %983 = vmatpush1.bf16.msra.mxu0 %v959
        %984 = vmatprep.subr.bf16.mxu0 0
        %985 = vmatpush1.bf16.msra.mxu0 0
        %986 = vmatprep.subr.bf16.mxu0 0
        %987 = vmatpush1.bf16.msra.mxu0 0
        %988 = vmatprep.subr.bf16.mxu0 0
        %989 = vmatpush1.bf16.msra.mxu0 0
        %990 = vmatprep.subr.bf16.mxu0 0
        %991 = vmatpush1.bf16.msra.mxu0 0
        %992 = vmatprep.subr.bf16.mxu0 0
        %993 = vmatpush1.bf16.msra.mxu0 0
        %994 = vmatprep.subr.bf16.mxu0 0
        %995 = vmatpush1.bf16.msra.mxu0 0
        %996 = vmatprep.subr.bf16.mxu0 0
        %997 = vmatpush1.bf16.msra.mxu0 0
        %998 = vmatprep.subr.bf16.mxu0 0
        %999 = vmatpush1.bf16.msra.mxu0 0
        %1000 = vmatprep.mubr.bf16.mxu0 0
        %1001 = vmatmul.mubr.bf16.gmra.mrb[0].mxu0 %v891
        %v1002 = vpop.f32.mrb[0].mxu0
        %v1003 = vadd.f32 %v918, %v1002
        %v1004 = vpop.f32.mrb[0].mxu0
        %v1005 = vpop.f32.mrb[0].mxu0
        %v1006 = vadd.f32 %v918, %v1005
        %v1007 = vpop.f32.mrb[0].mxu0
        %1008 = vmatprep.mubr.bf16.mxu0 0
        %1009 = vmatmul.mubr.bf16.gmra.mrb[0].mxu0 %v892
        %v1010 = vpop.f32.mrb[0].mxu0
        %v1011 = vadd.f32 %v918, %v1010
        %v1012 = vpop.f32.mrb[0].mxu0
        %v1013 = vpop.f32.mrb[0].mxu0
        %v1014 = vadd.f32 %v918, %v1013
        %v1015 = vpop.f32.mrb[0].mxu0
        %1016 = vmatprep.mubr.bf16.mxu0 0
        %1017 = vmatmul.mubr.bf16.gmra.mrb[0].mxu0 %v893
        %v1018 = vpop.f32.mrb[0].mxu0
        %v1019 = vadd.f32 %v918, %v1018
        %v1020 = vpop.f32.mrb[0].mxu0
        %v1021 = vpop.f32.mrb[0].mxu0
        %v1022 = vadd.f32 %v918, %v1021
        %v1023 = vpop.f32.mrb[0].mxu0
        %1024 = vmatprep.mubr.bf16.mxu0 0
        %1025 = vmatmul.mubr.bf16.gmra.mrb[0].mxu0 %v894
        %v1026 = vpop.f32.mrb[0].mxu0
        %v1027 = vadd.f32 %v918, %v1026
        %v1028 = vpop.f32.mrb[0].mxu0
        %v1029 = vpop.f32.mrb[0].mxu0
        %v1030 = vadd.f32 %v918, %v1029
        %v1031 = vpop.f32.mrb[0].mxu0
        %1032 = vdwg.mxu0
        %s1033 = scalar_lea.vmem [#allocation9], 64
        %v1034 = vld [vmem:[%s1033] sm:$0xf]
        %v1035 = vld [vmem:[%s1033 + $0x4] sm:$0xf]
        %v1036 = vld [vmem:[%s1033 + $0x8] sm:$0xf]
        %v1037 = vld [vmem:[%s1033 + $0xc] sm:$0xf]
        %v1038 = vld [vmem:[%s1033 + $0x10] sm:$0xf]
        %v1039 = vld [vmem:[%s1033 + $0x14] sm:$0xf]
        %v1040 = vld [vmem:[%s1033 + $0x18] sm:$0xf]
        %v1041 = vld [vmem:[%s1033 + $0x1c] sm:$0xf]
        %v1042 = vld [vmem:[%s1033 + $0x20] sm:$0xf]
        %v1043 = vld [vmem:[%s1033 + $0x24] sm:$0xf]
        %v1044 = vld [vmem:[%s1033 + $0x28] sm:$0xf]
        %v1045 = vld [vmem:[%s1033 + $0x2c] sm:$0xf]
        %v1046 = vld [vmem:[%s1033 + $0x30] sm:$0xf]
        %v1047 = vld [vmem:[%s1033 + $0x34] sm:$0xf]
        %v1048 = vld [vmem:[%s1033 + $0x38] sm:$0xf]
        %v1049 = vld [vmem:[%s1033 + $0x3c] sm:$0xf]
        %s1050 = scalar_lea.vmem [#allocation2], 8
        %v1051 = vld [vmem:[%s1050] sm:$0xff]
        %v1052 = vpack.c.bf16 %v1051, %v1051
        %v1069 = vunpack.c.l.b16 %v1034
        %v1070 = vunpack.c.l.b16 %v1035
        %v1071 = vunpack.c.l.b16 %v1036
        %v1072 = vunpack.c.l.b16 %v1037
        %v1073 = vunpack.c.l.b16 %v1038
        %v1074 = vunpack.c.l.b16 %v1039
        %v1075 = vunpack.c.l.b16 %v1040
        %v1076 = vunpack.c.l.b16 %v1041
        %v1077 = vunpack.c.l.b16 %v1042
        %v1078 = vunpack.c.l.b16 %v1043
        %v1079 = vunpack.c.l.b16 %v1044
        %v1080 = vunpack.c.l.b16 %v1045
        %v1081 = vunpack.c.l.b16 %v1046
        %v1082 = vunpack.c.l.b16 %v1047
        %v1083 = vunpack.c.l.b16 %v1048
        %v1084 = vunpack.c.l.b16 %v1049
        %v1085 = vpack.c.b16 %v1070, %v1069
        %v1086 = vpack.c.b16 %v1072, %v1071
        %v1087 = vpack.c.b16 %v1074, %v1073
        %v1088 = vpack.c.b16 %v1076, %v1075
        %v1089 = vpack.c.b16 %v1078, %v1077
        %v1090 = vpack.c.b16 %v1080, %v1079
        %v1091 = vpack.c.b16 %v1082, %v1081
        %v1092 = vpack.c.b16 %v1084, %v1083
        %1101 = vmatprep.subr.bf16.mxu0 0
        %1102 = vmatpush1.bf16.msra.mxu0 %v1085
        %1103 = vmatprep.subr.bf16.mxu0 0
        %1104 = vmatpush1.bf16.msra.mxu0 %v1086
        %1105 = vmatprep.subr.bf16.mxu0 0
        %1106 = vmatpush1.bf16.msra.mxu0 %v1087
        %1107 = vmatprep.subr.bf16.mxu0 0
        %1108 = vmatpush1.bf16.msra.mxu0 %v1088
        %1109 = vmatprep.subr.bf16.mxu0 0
        %1110 = vmatpush1.bf16.msra.mxu0 %v1089
        %1111 = vmatprep.subr.bf16.mxu0 0
        %1112 = vmatpush1.bf16.msra.mxu0 %v1090
        %1113 = vmatprep.subr.bf16.mxu0 0
        %1114 = vmatpush1.bf16.msra.mxu0 %v1091
        %1115 = vmatprep.subr.bf16.mxu0 0
        %1116 = vmatpush1.bf16.msra.mxu0 %v1092
        %1117 = vmatprep.subr.bf16.mxu0 0
        %1118 = vmatpush1.bf16.msra.mxu0 0
        %1119 = vmatprep.subr.bf16.mxu0 0
        %1120 = vmatpush1.bf16.msra.mxu0 0
        %1121 = vmatprep.subr.bf16.mxu0 0
        %1122 = vmatpush1.bf16.msra.mxu0 0
        %1123 = vmatprep.subr.bf16.mxu0 0
        %1124 = vmatpush1.bf16.msra.mxu0 0
        %1125 = vmatprep.subr.bf16.mxu0 0
        %1126 = vmatpush1.bf16.msra.mxu0 0
        %1127 = vmatprep.subr.bf16.mxu0 0
        %1128 = vmatpush1.bf16.msra.mxu0 0
        %1129 = vmatprep.subr.bf16.mxu0 0
        %1130 = vmatpush1.bf16.msra.mxu0 0
        %1131 = vmatprep.subr.bf16.mxu0 0
        %1132 = vmatpush1.bf16.msra.mxu0 0
        %1133 = vmatprep.mubr.bf16.mxu0 0
        %1134 = vmatmul.mubr.bf16.gmra.mrb[0].mxu0 %v1052
        %v1135 = vpop.f32.mrb[0].mxu0
        %v1136 = vadd.f32 0.0, %v1135
        %v1137 = vpop.f32.mrb[0].mxu0
        %v1138 = vpop.f32.mrb[0].mxu0
        %v1139 = vpop.f32.mrb[0].mxu0
        %1140 = vdwg.mxu0
        %v1141 = vadd.f32 %v1003, %v1136
        %v1142 = vtanh.pop %v1141
        %v1143 = vpack.c.bf16 %v1142, %v1142
        %1144 = vmatprep.subr.bf16.mxu0 0
        %1145 = vmatpush1.bf16.msra.mxu0 %v1085
        %1146 = vmatprep.subr.bf16.mxu0 0
        %1147 = vmatpush1.bf16.msra.mxu0 %v1086
        %1148 = vmatprep.subr.bf16.mxu0 0
        %1149 = vmatpush1.bf16.msra.mxu0 %v1087
        %1150 = vmatprep.subr.bf16.mxu0 0
        %1151 = vmatpush1.bf16.msra.mxu0 %v1088
        %1152 = vmatprep.subr.bf16.mxu0 0
        %1153 = vmatpush1.bf16.msra.mxu0 %v1089
        %1154 = vmatprep.subr.bf16.mxu0 0
        %1155 = vmatpush1.bf16.msra.mxu0 %v1090
        %1156 = vmatprep.subr.bf16.mxu0 0
        %1157 = vmatpush1.bf16.msra.mxu0 %v1091
        %1158 = vmatprep.subr.bf16.mxu0 0
        %1159 = vmatpush1.bf16.msra.mxu0 %v1092
        %1160 = vmatprep.subr.bf16.mxu0 0
        %1161 = vmatpush1.bf16.msra.mxu0 0
        %1162 = vmatprep.subr.bf16.mxu0 0
        %1163 = vmatpush1.bf16.msra.mxu0 0
        %1164 = vmatprep.subr.bf16.mxu0 0
        %1165 = vmatpush1.bf16.msra.mxu0 0
        %1166 = vmatprep.subr.bf16.mxu0 0
        %1167 = vmatpush1.bf16.msra.mxu0 0
        %1168 = vmatprep.subr.bf16.mxu0 0
        %1169 = vmatpush1.bf16.msra.mxu0 0
        %1170 = vmatprep.subr.bf16.mxu0 0
        %1171 = vmatpush1.bf16.msra.mxu0 0
        %1172 = vmatprep.subr.bf16.mxu0 0
        %1173 = vmatpush1.bf16.msra.mxu0 0
        %1174 = vmatprep.subr.bf16.mxu0 0
        %1175 = vmatpush1.bf16.msra.mxu0 0
        %1176 = vmatprep.mubr.bf16.mxu0 0
        %1177 = vmatmul.mubr.bf16.gmra.mrb[0].mxu0 %v1143
        %v1178 = vpop.f32.mrb[0].mxu0
        %v1179 = vadd.f32 0.0, %v1178
        %v1180 = vpop.f32.mrb[0].mxu0
        %v1181 = vpop.f32.mrb[0].mxu0
        %v1182 = vpop.f32.mrb[0].mxu0
        %1183 = vdwg.mxu0
        %v1184 = vadd.f32 %v1006, %v1179
        %v1185 = vtanh.pop %v1184
        %v1186 = vpack.c.bf16 %v1185, %v1185
        %1187 = vmatprep.subr.bf16.mxu0 0
        %1188 = vmatpush1.bf16.msra.mxu0 %v1085
        %1189 = vmatprep.subr.bf16.mxu0 0
        %1190 = vmatpush1.bf16.msra.mxu0 %v1086
        %1191 = vmatprep.subr.bf16.mxu0 0
        %1192 = vmatpush1.bf16.msra.mxu0 %v1087
        %1193 = vmatprep.subr.bf16.mxu0 0
        %1194 = vmatpush1.bf16.msra.mxu0 %v1088
        %1195 = vmatprep.subr.bf16.mxu0 0
        %1196 = vmatpush1.bf16.msra.mxu0 %v1089
        %1197 = vmatprep.subr.bf16.mxu0 0
        %1198 = vmatpush1.bf16.msra.mxu0 %v1090
        %1199 = vmatprep.subr.bf16.mxu0 0
        %1200 = vmatpush1.bf16.msra.mxu0 %v1091
        %1201 = vmatprep.subr.bf16.mxu0 0
        %1202 = vmatpush1.bf16.msra.mxu0 %v1092
        %1203 = vmatprep.subr.bf16.mxu0 0
        %1204 = vmatpush1.bf16.msra.mxu0 0
        %1205 = vmatprep.subr.bf16.mxu0 0
        %1206 = vmatpush1.bf16.msra.mxu0 0
        %1207 = vmatprep.subr.bf16.mxu0 0
        %1208 = vmatpush1.bf16.msra.mxu0 0
        %1209 = vmatprep.subr.bf16.mxu0 0
        %1210 = vmatpush1.bf16.msra.mxu0 0
        %1211 = vmatprep.subr.bf16.mxu0 0
        %1212 = vmatpush1.bf16.msra.mxu0 0
        %1213 = vmatprep.subr.bf16.mxu0 0
        %1214 = vmatpush1.bf16.msra.mxu0 0
        %1215 = vmatprep.subr.bf16.mxu0 0
        %1216 = vmatpush1.bf16.msra.mxu0 0
        %1217 = vmatprep.subr.bf16.mxu0 0
        %1218 = vmatpush1.bf16.msra.mxu0 0
        %1219 = vmatprep.mubr.bf16.mxu0 0
        %1220 = vmatmul.mubr.bf16.gmra.mrb[0].mxu0 %v1186
        %v1221 = vpop.f32.mrb[0].mxu0
        %v1222 = vadd.f32 0.0, %v1221
        %v1223 = vpop.f32.mrb[0].mxu0
        %v1224 = vpop.f32.mrb[0].mxu0
        %v1225 = vpop.f32.mrb[0].mxu0
        %1226 = vdwg.mxu0
        %v1227 = vadd.f32 %v1011, %v1222
        %v1228 = vtanh.pop %v1227
        %v1229 = vpack.c.bf16 %v1228, %v1228
        %1230 = vmatprep.subr.bf16.mxu0 0
        %1231 = vmatpush1.bf16.msra.mxu0 %v1085
        %1232 = vmatprep.subr.bf16.mxu0 0
        %1233 = vmatpush1.bf16.msra.mxu0 %v1086
        %1234 = vmatprep.subr.bf16.mxu0 0
        %1235 = vmatpush1.bf16.msra.mxu0 %v1087
        %1236 = vmatprep.subr.bf16.mxu0 0
        %1237 = vmatpush1.bf16.msra.mxu0 %v1088
        %1238 = vmatprep.subr.bf16.mxu0 0
        %1239 = vmatpush1.bf16.msra.mxu0 %v1089
        %1240 = vmatprep.subr.bf16.mxu0 0
        %1241 = vmatpush1.bf16.msra.mxu0 %v1090
        %1242 = vmatprep.subr.bf16.mxu0 0
        %1243 = vmatpush1.bf16.msra.mxu0 %v1091
        %1244 = vmatprep.subr.bf16.mxu0 0
        %1245 = vmatpush1.bf16.msra.mxu0 %v1092
        %1246 = vmatprep.subr.bf16.mxu0 0
        %1247 = vmatpush1.bf16.msra.mxu0 0
        %1248 = vmatprep.subr.bf16.mxu0 0
        %1249 = vmatpush1.bf16.msra.mxu0 0
        %1250 = vmatprep.subr.bf16.mxu0 0
        %1251 = vmatpush1.bf16.msra.mxu0 0
        %1252 = vmatprep.subr.bf16.mxu0 0
        %1253 = vmatpush1.bf16.msra.mxu0 0
        %1254 = vmatprep.subr.bf16.mxu0 0
        %1255 = vmatpush1.bf16.msra.mxu0 0
        %1256 = vmatprep.subr.bf16.mxu0 0
        %1257 = vmatpush1.bf16.msra.mxu0 0
        %1258 = vmatprep.subr.bf16.mxu0 0
        %1259 = vmatpush1.bf16.msra.mxu0 0
        %1260 = vmatprep.subr.bf16.mxu0 0
        %1261 = vmatpush1.bf16.msra.mxu0 0
        %1262 = vmatprep.mubr.bf16.mxu0 0
        %1263 = vmatmul.mubr.bf16.gmra.mrb[0].mxu0 %v1229
        %v1264 = vpop.f32.mrb[0].mxu0
        %v1265 = vadd.f32 0.0, %v1264
        %v1266 = vpop.f32.mrb[0].mxu0
        %v1267 = vpop.f32.mrb[0].mxu0
        %v1268 = vpop.f32.mrb[0].mxu0
        %1269 = vdwg.mxu0
        %v1270 = vadd.f32 %v1014, %v1265
        %v1271 = vtanh.pop %v1270
        %v1272 = vpack.c.bf16 %v1271, %v1271
        %1273 = vmatprep.subr.bf16.mxu0 0
        %1274 = vmatpush1.bf16.msra.mxu0 %v1085
        %1275 = vmatprep.subr.bf16.mxu0 0
        %1276 = vmatpush1.bf16.msra.mxu0 %v1086
        %1277 = vmatprep.subr.bf16.mxu0 0
        %1278 = vmatpush1.bf16.msra.mxu0 %v1087
        %1279 = vmatprep.subr.bf16.mxu0 0
        %1280 = vmatpush1.bf16.msra.mxu0 %v1088
        %1281 = vmatprep.subr.bf16.mxu0 0
        %1282 = vmatpush1.bf16.msra.mxu0 %v1089
        %1283 = vmatprep.subr.bf16.mxu0 0
        %1284 = vmatpush1.bf16.msra.mxu0 %v1090
        %1285 = vmatprep.subr.bf16.mxu0 0
        %1286 = vmatpush1.bf16.msra.mxu0 %v1091
        %1287 = vmatprep.subr.bf16.mxu0 0
        %1288 = vmatpush1.bf16.msra.mxu0 %v1092
        %1289 = vmatprep.subr.bf16.mxu0 0
        %1290 = vmatpush1.bf16.msra.mxu0 0
        %1291 = vmatprep.subr.bf16.mxu0 0
        %1292 = vmatpush1.bf16.msra.mxu0 0
        %1293 = vmatprep.subr.bf16.mxu0 0
        %1294 = vmatpush1.bf16.msra.mxu0 0
        %1295 = vmatprep.subr.bf16.mxu0 0
        %1296 = vmatpush1.bf16.msra.mxu0 0
        %1297 = vmatprep.subr.bf16.mxu0 0
        %1298 = vmatpush1.bf16.msra.mxu0 0
        %1299 = vmatprep.subr.bf16.mxu0 0
        %1300 = vmatpush1.bf16.msra.mxu0 0
        %1301 = vmatprep.subr.bf16.mxu0 0
        %1302 = vmatpush1.bf16.msra.mxu0 0
        %1303 = vmatprep.subr.bf16.mxu0 0
        %1304 = vmatpush1.bf16.msra.mxu0 0
        %1305 = vmatprep.mubr.bf16.mxu0 0
        %1306 = vmatmul.mubr.bf16.gmra.mrb[0].mxu0 %v1272
        %v1307 = vpop.f32.mrb[0].mxu0
        %v1308 = vadd.f32 0.0, %v1307
        %v1309 = vpop.f32.mrb[0].mxu0
        %v1310 = vpop.f32.mrb[0].mxu0
        %v1311 = vpop.f32.mrb[0].mxu0
        %1312 = vdwg.mxu0
        %v1313 = vadd.f32 %v1019, %v1308
        %v1314 = vtanh.pop %v1313
        %v1315 = vpack.c.bf16 %v1314, %v1314
        %1316 = vmatprep.subr.bf16.mxu0 0
        %1317 = vmatpush1.bf16.msra.mxu0 %v1085
        %1318 = vmatprep.subr.bf16.mxu0 0
        %1319 = vmatpush1.bf16.msra.mxu0 %v1086
        %1320 = vmatprep.subr.bf16.mxu0 0
        %1321 = vmatpush1.bf16.msra.mxu0 %v1087
        %1322 = vmatprep.subr.bf16.mxu0 0
        %1323 = vmatpush1.bf16.msra.mxu0 %v1088
        %1324 = vmatprep.subr.bf16.mxu0 0
        %1325 = vmatpush1.bf16.msra.mxu0 %v1089
        %1326 = vmatprep.subr.bf16.mxu0 0
        %1327 = vmatpush1.bf16.msra.mxu0 %v1090
        %1328 = vmatprep.subr.bf16.mxu0 0
        %1329 = vmatpush1.bf16.msra.mxu0 %v1091
        %1330 = vmatprep.subr.bf16.mxu0 0
        %1331 = vmatpush1.bf16.msra.mxu0 %v1092
        %1332 = vmatprep.subr.bf16.mxu0 0
        %1333 = vmatpush1.bf16.msra.mxu0 0
        %1334 = vmatprep.subr.bf16.mxu0 0
        %1335 = vmatpush1.bf16.msra.mxu0 0
        %1336 = vmatprep.subr.bf16.mxu0 0
        %1337 = vmatpush1.bf16.msra.mxu0 0
        %1338 = vmatprep.subr.bf16.mxu0 0
        %1339 = vmatpush1.bf16.msra.mxu0 0
        %1340 = vmatprep.subr.bf16.mxu0 0
        %1341 = vmatpush1.bf16.msra.mxu0 0
        %1342 = vmatprep.subr.bf16.mxu0 0
        %1343 = vmatpush1.bf16.msra.mxu0 0
        %1344 = vmatprep.subr.bf16.mxu0 0
        %1345 = vmatpush1.bf16.msra.mxu0 0
        %1346 = vmatprep.subr.bf16.mxu0 0
        %1347 = vmatpush1.bf16.msra.mxu0 0
        %1348 = vmatprep.mubr.bf16.mxu0 0
        %1349 = vmatmul.mubr.bf16.gmra.mrb[0].mxu0 %v1315
        %v1350 = vpop.f32.mrb[0].mxu0
        %v1351 = vadd.f32 0.0, %v1350
        %v1352 = vpop.f32.mrb[0].mxu0
        %v1353 = vpop.f32.mrb[0].mxu0
        %v1354 = vpop.f32.mrb[0].mxu0
        %1355 = vdwg.mxu0
        %v1356 = vadd.f32 %v1022, %v1351
        %v1357 = vtanh.pop %v1356
        %v1358 = vpack.c.bf16 %v1357, %v1357
        %1359 = vmatprep.subr.bf16.mxu0 0
        %1360 = vmatpush1.bf16.msra.mxu0 %v1085
        %1361 = vmatprep.subr.bf16.mxu0 0
        %1362 = vmatpush1.bf16.msra.mxu0 %v1086
        %1363 = vmatprep.subr.bf16.mxu0 0
        %1364 = vmatpush1.bf16.msra.mxu0 %v1087
        %1365 = vmatprep.subr.bf16.mxu0 0
        %1366 = vmatpush1.bf16.msra.mxu0 %v1088
        %1367 = vmatprep.subr.bf16.mxu0 0
        %1368 = vmatpush1.bf16.msra.mxu0 %v1089
        %1369 = vmatprep.subr.bf16.mxu0 0
        %1370 = vmatpush1.bf16.msra.mxu0 %v1090
        %1371 = vmatprep.subr.bf16.mxu0 0
        %1372 = vmatpush1.bf16.msra.mxu0 %v1091
        %1373 = vmatprep.subr.bf16.mxu0 0
        %1374 = vmatpush1.bf16.msra.mxu0 %v1092
        %1375 = vmatprep.subr.bf16.mxu0 0
        %1376 = vmatpush1.bf16.msra.mxu0 0
        %1377 = vmatprep.subr.bf16.mxu0 0
        %1378 = vmatpush1.bf16.msra.mxu0 0
        %1379 = vmatprep.subr.bf16.mxu0 0
        %1380 = vmatpush1.bf16.msra.mxu0 0
        %1381 = vmatprep.subr.bf16.mxu0 0
        %1382 = vmatpush1.bf16.msra.mxu0 0
        %1383 = vmatprep.subr.bf16.mxu0 0
        %1384 = vmatpush1.bf16.msra.mxu0 0
        %1385 = vmatprep.subr.bf16.mxu0 0
        %1386 = vmatpush1.bf16.msra.mxu0 0
        %1387 = vmatprep.subr.bf16.mxu0 0
        %1388 = vmatpush1.bf16.msra.mxu0 0
        %1389 = vmatprep.subr.bf16.mxu0 0
        %1390 = vmatpush1.bf16.msra.mxu0 0
        %1391 = vmatprep.mubr.bf16.mxu0 0
        %1392 = vmatmul.mubr.bf16.gmra.mrb[0].mxu0 %v1358
        %v1393 = vpop.f32.mrb[0].mxu0
        %v1394 = vadd.f32 0.0, %v1393
        %v1395 = vpop.f32.mrb[0].mxu0
        %v1396 = vpop.f32.mrb[0].mxu0
        %v1397 = vpop.f32.mrb[0].mxu0
        %1398 = vdwg.mxu0
        %v1399 = vadd.f32 %v1027, %v1394
        %v1400 = vtanh.pop %v1399
        %v1401 = vpack.c.bf16 %v1400, %v1400
        %1402 = vmatprep.subr.bf16.mxu0 0
        %1403 = vmatpush1.bf16.msra.mxu0 %v1085
        %1404 = vmatprep.subr.bf16.mxu0 0
        %1405 = vmatpush1.bf16.msra.mxu0 %v1086
        %1406 = vmatprep.subr.bf16.mxu0 0
        %1407 = vmatpush1.bf16.msra.mxu0 %v1087
        %1408 = vmatprep.subr.bf16.mxu0 0
        %1409 = vmatpush1.bf16.msra.mxu0 %v1088
        %1410 = vmatprep.subr.bf16.mxu0 0
        %1411 = vmatpush1.bf16.msra.mxu0 %v1089
        %1412 = vmatprep.subr.bf16.mxu0 0
        %1413 = vmatpush1.bf16.msra.mxu0 %v1090
        %1414 = vmatprep.subr.bf16.mxu0 0
        %1415 = vmatpush1.bf16.msra.mxu0 %v1091
        %1416 = vmatprep.subr.bf16.mxu0 0
        %1417 = vmatpush1.bf16.msra.mxu0 %v1092
        %1418 = vmatprep.subr.bf16.mxu0 0
        %1419 = vmatpush1.bf16.msra.mxu0 0
        %1420 = vmatprep.subr.bf16.mxu0 0
        %1421 = vmatpush1.bf16.msra.mxu0 0
        %1422 = vmatprep.subr.bf16.mxu0 0
        %1423 = vmatpush1.bf16.msra.mxu0 0
        %1424 = vmatprep.subr.bf16.mxu0 0
        %1425 = vmatpush1.bf16.msra.mxu0 0
        %1426 = vmatprep.subr.bf16.mxu0 0
        %1427 = vmatpush1.bf16.msra.mxu0 0
        %1428 = vmatprep.subr.bf16.mxu0 0
        %1429 = vmatpush1.bf16.msra.mxu0 0
        %1430 = vmatprep.subr.bf16.mxu0 0
        %1431 = vmatpush1.bf16.msra.mxu0 0
        %1432 = vmatprep.subr.bf16.mxu0 0
        %1433 = vmatpush1.bf16.msra.mxu0 0
        %1434 = vmatprep.mubr.bf16.mxu0 0
        %1435 = vmatmul.mubr.bf16.gmra.mrb[0].mxu0 %v1401
        %v1436 = vpop.f32.mrb[0].mxu0
        %v1437 = vadd.f32 0.0, %v1436
        %v1438 = vpop.f32.mrb[0].mxu0
        %v1439 = vpop.f32.mrb[0].mxu0
        %v1440 = vpop.f32.mrb[0].mxu0
        %1441 = vdwg.mxu0
        %v1442 = vadd.f32 %v1030, %v1437
        %v1443 = vtanh.pop %v1442
        %1444 = vst [vmem:[%s1050] sm:$0xff] %v1443
        %p1445 = scmp.eq.s32.totalorder %s23, 1
        // Predicated region
        $region65: #{tpu_custom_call.1} parent=43 // pred_check
          %p1446 = pneg %p1445
        $region66: #{tpu_custom_call.1} parent=43 // pred_check_branch
          %1448 = sbr.rel (%p1446) target = $region68
        $region67: #{tpu_custom_call.1} parent=43 // pred_region
          %v1449 = vld [vmem:[%s1050] sm:$0xff]
          %v1450 = vld [vmem:[#allocation10] sm:$0xff]
          %v1451 = vld [vmem:[#allocation10 + $0x8] sm:$0xff]
          %v1452 = vld [vmem:[#allocation10 + $0x10] sm:$0xff]
          %v1453 = vld [vmem:[#allocation10 + $0x18] sm:$0xff]
          %v1454 = vld [vmem:[#allocation10 + $0x20] sm:$0xff]
          %v1455 = vld [vmem:[#allocation10 + $0x28] sm:$0xff]
          %v1456 = vld [vmem:[#allocation10 + $0x30] sm:$0xff]
          %v1457 = vld [vmem:[#allocation10 + $0x38] sm:$0xff]
          %v1458 = vld [vmem:[#allocation10 + $0x40] sm:$0xff]
          %v1459 = vld [vmem:[#allocation10 + $0x48] sm:$0xff]
          %v1460 = vld [vmem:[#allocation10 + $0x50] sm:$0xff]
          %v1461 = vld [vmem:[#allocation10 + $0x58] sm:$0xff]
          %v1462 = vld [vmem:[#allocation10 + $0x60] sm:$0xff]
          %v1463 = vld [vmem:[#allocation10 + $0x68] sm:$0xff]
          %v1464 = vld [vmem:[#allocation10 + $0x70] sm:$0xff]
          %v1465 = vld [vmem:[#allocation10 + $0x78] sm:$0xff]
          %v1466 = vld [vmem:[%s5] sm:$0x1]
          %v1468 = vlaneseq
          %v1469 = vshrl.u32 %v1468, 7
          %v1470 = vsub.s32 0, %v1469
          %v1471 = vrot.slane %v1466, %v1470
          %1473 = vmatprep.subr.mxu0 0.0
          %1474 = vmatpush1.msra.mxu0 %v1450
          %1475 = vmatprep.subr.mxu0 0.0
          %1476 = vmatpush1.msra.mxu0 %v1451
          %1477 = vmatprep.subr.mxu0 0.0
          %1478 = vmatpush1.msra.mxu0 %v1452
          %1479 = vmatprep.subr.mxu0 0.0
          %1480 = vmatpush1.msra.mxu0 %v1453
          %1481 = vmatprep.subr.mxu0 0.0
          %1482 = vmatpush1.msra.mxu0 %v1454
          %1483 = vmatprep.subr.mxu0 0.0
          %1484 = vmatpush1.msra.mxu0 %v1455
          %1485 = vmatprep.subr.mxu0 0.0
          %1486 = vmatpush1.msra.mxu0 %v1456
          %1487 = vmatprep.subr.mxu0 0.0
          %1488 = vmatpush1.msra.mxu0 %v1457
          %1489 = vmatprep.subr.mxu0 0.0
          %1490 = vmatpush1.msra.mxu0 %v1458
          %1491 = vmatprep.subr.mxu0 0.0
          %1492 = vmatpush1.msra.mxu0 %v1459
          %1493 = vmatprep.subr.mxu0 0.0
          %1494 = vmatpush1.msra.mxu0 %v1460
          %1495 = vmatprep.subr.mxu0 0.0
          %1496 = vmatpush1.msra.mxu0 %v1461
          %1497 = vmatprep.subr.mxu0 0.0
          %1498 = vmatpush1.msra.mxu0 %v1462
          %1499 = vmatprep.subr.mxu0 0.0
          %1500 = vmatpush1.msra.mxu0 %v1463
          %1501 = vmatprep.subr.mxu0 0.0
          %1502 = vmatpush1.msra.mxu0 %v1464
          %1503 = vmatprep.subr.mxu0 0.0
          %1504 = vmatpush1.msra.mxu0 %v1465
          %1505 = vmatprep.subr.mxu0 0.0
          %1506 = vmatpush1.msra.mxu0 0.0
          %1507 = vmatprep.subr.mxu0 0.0
          %1508 = vmatpush1.msra.mxu0 0.0
          %1509 = vmatprep.subr.mxu0 0.0
          %1510 = vmatpush1.msra.mxu0 0.0
          %1511 = vmatprep.subr.mxu0 0.0
          %1512 = vmatpush1.msra.mxu0 0.0
          %1513 = vmatprep.subr.mxu0 0.0
          %1514 = vmatpush1.msra.mxu0 0.0
          %1515 = vmatprep.subr.mxu0 0.0
          %1516 = vmatpush1.msra.mxu0 0.0
          %1517 = vmatprep.subr.mxu0 0.0
          %1518 = vmatpush1.msra.mxu0 0.0
          %1519 = vmatprep.subr.mxu0 0.0
          %1520 = vmatpush1.msra.mxu0 0.0
          %1521 = vmatprep.subr.mxu0 0.0
          %1522 = vmatpush1.msra.mxu0 0.0
          %1523 = vmatprep.subr.mxu0 0.0
          %1524 = vmatpush1.msra.mxu0 0.0
          %1525 = vmatprep.subr.mxu0 0.0
          %1526 = vmatpush1.msra.mxu0 0.0
          %1527 = vmatprep.subr.mxu0 0.0
          %1528 = vmatpush1.msra.mxu0 0.0
          %1529 = vmatprep.subr.mxu0 0.0
          %1530 = vmatpush1.msra.mxu0 0.0
          %1531 = vmatprep.subr.mxu0 0.0
          %1532 = vmatpush1.msra.mxu0 0.0
          %1533 = vmatprep.subr.mxu0 0.0
          %1534 = vmatpush1.msra.mxu0 0.0
          %1535 = vmatprep.subr.mxu0 0.0
          %1536 = vmatpush1.msra.mxu0 0.0
          %1537 = vmatprep.mubr.f32.mxu0 0.0
          %1538 = vmatmul.mubr.f32.gmra.mrb[0].mxu0 %v1449
          %v1539 = vpop.f32.mrb[0].mxu0
          %v1540 = vadd.f32 %v1471, %v1539
          %v1541 = vpop.f32.mrb[0].mxu0
          %1542 = vdwg.mxu0
          %1543 = vst [vmem:[#allocation12] sm:$0xff] %v1540
        $region68: #{tpu_custom_call.1} parent=43 // pred_fallthru
          _
        // Predicated region
        $region69: #{tpu_custom_call.1} parent=43 // pred_check
          %p1544 = pneg %p167
        $region70: #{tpu_custom_call.1} parent=43 // pred_check_branch
          %1546 = sbr.rel (%p1544) target = $region72
        $region71: #{tpu_custom_call.1} parent=43 // pred_region
          %s1548 = ssub.s32 128, 128
          %1549 = vsyncadd [#allocation6], %s1548
          %s1551 = sshll.u32 [#allocation12], 4
          %s1552 = int_to_ptr.vmem [resolvable:$true] %s1551
          %1554 = dma.vmem_to_hbm [thread:$0]  %s1552, 128, %s6, [#allocation6]
        $region72: #{tpu_custom_call.1} parent=43 // pred_fallthru
          _
        // Predicated region
        $region73: #{tpu_custom_call.1} parent=43 // pred_check
          %p1555 = pneg %p167
        $region74: #{tpu_custom_call.1} parent=43 // pred_check_branch
          %1557 = sbr.rel (%p1555) target = $region76
        $region75: #{tpu_custom_call.1} parent=43 // pred_region
          %1558 = dma.done [#allocation6], 128
        $region76: #{tpu_custom_call.1} parent=43 // pred_fallthru
          _
      $region44: #{tpu_custom_call.1} parent=5 // pred_fallthru
        _
      %p1559 = scmp.le.s32.totalorder 2, %s18
      // Predicated region
      $region77: #{tpu_custom_call.1} parent=5 // pred_check
        %p1560 = pneg %p1559
      $region78: #{tpu_custom_call.1} parent=5 // pred_check_branch
        %1562 = sbr.rel (%p1560) target = $region80
      $region79: #{tpu_custom_call.1} parent=5 // pred_region
        %s1563 = ssub.s32 %s18, 2
      $region80: #{tpu_custom_call.1} parent=5 // pred_fallthru
        _
    $region6: #{tpu_custom_call.1} parent=1 // loop_footer
      %s22 = sadd.s32 1, %s18
    $region7: #{tpu_custom_call.1} parent=1 // loop_footer_branch
      %17 = sbr.rel target = $region3
    $region8: #{tpu_custom_call.1} parent=1 // loop_exit
      _
    %1564 = vsyncpa [#allocation5], 1
    %s1565 = scalar_lea.sflag [#allocation5], 1
    %1566 = vsyncpa %s1565, 1
    %1567 = vsyncpa [#allocation8], 1
    %1568 = vsyncpa [#allocation11], 1
    %1569 = vsyncpa [#allocation6], 1
    %s1570 = scalar_lea.sflag [#allocation6], 1
    %1571 = vsyncpa %s1570, 1

</llo_original>
